<compile_context>
chip_gen: v6e
topology: v6e:2x2x1
jax: 0.10.0
libtpu: 0.0.40
codegen_flags: <defaults>
</compile_context>

<pallas_src>
import functools

import jax
import jax.numpy as jnp
from jax.experimental import pallas as pl
from jax.experimental.pallas import tpu as pltpu


def _round_up(x, m):
    return (x + m - 1) // m * m


def _fused_unet_conv2_kernel(x_hbm, w1_ref, s1_ref, b1_ref,
                             w2_ref, s2_ref, b2_ref, o_ref,
                             xbuf_ref, h1_ref, dma_sem,
                             *, W, hwin, offs1, xbuf_slack):
    """One (batch, row-tile) grid step of ReLU(BN2(Conv2(ReLU(BN1(Conv1(x)))))).

    x_hbm:    (N, R, K1p)           packed input rows, raw HBM ref (pl.ANY)
    w1_ref:   (n_mm1, K1p, C1p)     stage-1 weights (taps folded into K/groups)
    s1/b1:    (1, C1p)              folded BN1 scale / shift (f32)
    w2_ref:   (9, C1p, C2p)         stage-2 per-tap weights
    s2/b2:    (1, C2p)              folded BN2 scale / shift (f32)
    o_ref:    (1, TH, W, C2p)       output row tile (full padded width)
    xbuf_ref: (2, hwin+slack, K1p)  double-buffered halo'd input window
    h1_ref:   (L1+8, C1p)           stage-1 activation (+8 zeroed slack rows)
    dma_sem:  (2,)                  per-slot DMA semaphores
    """
    n = pl.program_id(0)
    t = pl.program_id(1)
    n_tiles = pl.num_programs(1)

    TH = o_ref.shape[1]
    C1p = s1_ref.shape[1]
    C2p = o_ref.shape[3]
    L1 = (TH + 2) * W            # stage-1 rows (flattened) needed by this tile
    L2 = TH * W                  # stage-2 (output) rows
    THW = TH * W

    slot = t % 2

    def fetch(tile, which):
        src = x_hbm.at[n, pl.ds(tile * THW, hwin), :]
        if xbuf_slack:
            dst = xbuf_ref.at[which, pl.ds(0, hwin), :]
        else:
            dst = xbuf_ref.at[which]
        return pltpu.make_async_copy(src, dst, dma_sem.at[which])

    # Double-buffered halo DMA: prime on the first tile of each image, then
    # prefetch the next tile's window while this one computes.  Requires the
    # row-tile grid axis to be "arbitrary" (sequential per core).
    @pl.when(t == 0)
    def _():
        fetch(0, 0).start()

    @pl.when(t + 1 < n_tiles)
    def _():
        fetch(t + 1, 1 - slot).start()

    fetch(t, slot).wait()

    # ---- stage 1: 3x3 valid conv (taps packed into K) + BN1 + ReLU ---------
    if len(offs1) == 1 and offs1[0] == 0 and not xbuf_slack:
        # Full im2col packing: the whole window is the single matmul LHS.
        acc1 = jnp.dot(xbuf_ref[slot], w1_ref[0],
                       preferred_element_type=jnp.float32)
    else:
        acc1 = None
        for i, off in enumerate(offs1):
            r = jnp.dot(xbuf_ref[slot, pl.ds(off, L1), :], w1_ref[i],
                        preferred_element_type=jnp.float32)
            acc1 = r if acc1 is None else acc1 + r
    y1 = jnp.maximum(acc1 * s1_ref[...] + b1_ref[...], 0.0)
    h1_ref[pl.ds(0, L1), :] = y1.astype(h1_ref.dtype)
    # Keep the 8 slack rows (touched by the dj>0 taps of the last output rows,
    # whose results land only in discarded columns) finite.
    h1_ref[pl.ds(L1, 8), :] = jnp.zeros((8, C1p), h1_ref.dtype)

    # ---- stage 2: 3x3 valid conv, 9 LHS-shifted taps + BN2 + ReLU ----------
    acc2 = None
    for di in range(3):
        for dj in range(3):
            r = jnp.dot(h1_ref[pl.ds(di * W + dj, L2), :],
                        w2_ref[di * 3 + dj],
                        preferred_element_type=jnp.float32)
            acc2 = r if acc2 is None else acc2 + r
    y2 = jnp.maximum(acc2 * s2_ref[...] + b2_ref[...], 0.0)
    # NOTE: columns >= W-4 and any zero-padded tail rows contain wrapped-tap
    # garbage; the wrapper slices them off (do not consume o_ref directly).
    o_ref[...] = y2.reshape(1, TH, W, C2p).astype(o_ref.dtype)


def fold_bn(conv_bias, gamma, beta, running_mean, running_var, eps=1e-5):
    """Fold Conv bias + BatchNorm2d (eval mode) into per-channel scale/shift."""
    scale = gamma / jnp.sqrt(running_var + eps)
    shift = (conv_bias - running_mean) * scale + beta
    return scale, shift


def _prep_weights(w_oihw, pack, k_pad, cout_pad, dtype):
    """OIHW -> (n_groups, K, Cout): `pack` taps folded into K, zero-padded."""
    cout, cin = w_oihw.shape[0], w_oihw.shape[1]
    w = jnp.transpose(w_oihw, (2, 3, 1, 0)).astype(jnp.float32)   # (di,dj,ci,co)
    if pack == 9:
        wk = w.reshape(1, 9 * cin, cout)          # K index = (di*3+dj)*cin + ci
    elif pack == 3:
        wk = w.reshape(3, 3 * cin, cout)          # group di, K index = dj*cin + ci
    else:
        wk = w.reshape(9, cin, cout)              # group di*3+dj, K index = ci
    wk = jnp.pad(wk, ((0, 0), (0, k_pad - wk.shape[1]), (0, cout_pad - cout)))
    return wk.astype(dtype)


def _pack_input(x_nhwc, pack):
    """Fold `pack` (1/3/9) conv-1 taps of x into the channel (K) dimension."""
    if pack == 1:
        return x_nhwc
    taps = []
    dis = range(3) if pack == 9 else (0,)
    for di in dis:
        for dj in range(3):
            tsl = x_nhwc[:, di:, dj:, :]
            taps.append(jnp.pad(tsl, ((0, 0), (0, di), (0, dj), (0, 0))))
    return jnp.concatenate(taps, axis=-1)


def unet_conv2_forward(x_nchw, params, *, row_tile=None,
                       compute_dtype=jnp.bfloat16, h1_dtype=None,
                       lane=128, vmem_budget_bytes=20 * 1024 * 1024):
    """unetConv2.forward (is_batchnorm=True, eval mode).

    x_nchw: (N, Cin, H, W) -> (N, Cout, H-4, W-4), dtype = compute_dtype.
    """
    N, Cin, H, W = x_nchw.shape
    Cout = params["w1"].shape[0]
    assert H >= 5 and W >= 5, "need at least 5x5 spatial for two valid 3x3 convs"
    Ho2, Wo2 = H - 4, W - 4
    h1_dtype = compute_dtype if h1_dtype is None else h1_dtype

    # Taps of conv1 folded into the matmul K dimension.  Packing is free (same
    # HBM bytes) whenever the packed K still fits one 128-lane pad (the tiny
    # Cin of the first UNet block); otherwise fall back to per-tap LHS shifts.
    if 9 * Cin <= lane:
        pack = 9
    elif 3 * Cin <= lane:
        pack = 3
    else:
        pack = 1
    n_mm1 = 9 // pack
    K1p = _round_up(pack * Cin, lane)
    C1p = _round_up(Cout, lane)
    C2p = _round_up(Cout, lane)
    halo = 2 if pack == 9 else 4
    xbuf_slack = 8 if pack == 1 else 0      # dj=2 tap peeks 2 rows past hwin

    in_item = jnp.dtype(compute_dtype).itemsize
    h1_item = jnp.dtype(h1_dtype).itemsize
    out_item = jnp.dtype(compute_dtype).itemsize

    # ---- row tile from a VMEM budget (fits v7x's 64 MiB), cdiv grid with a
    # zero-padded tail tile instead of a divisor-only search ------------------
    per_row = W * (2 * K1p * in_item            # double-buffered input window
                   + C1p * h1_item              # stage-1 activation scratch
                   + 2 * C2p * out_item         # pipelined output block
                   + 4 * (C1p + C2p))           # f32 accumulators / MXU temps
    fixed = ((n_mm1 * K1p * C1p + 9 * C1p * C2p) * in_item
             + 2 * halo * W * K1p * in_item)
    if row_tile is None:
        th = max(int((vmem_budget_bytes - fixed) // max(per_row, 1)), 1)
        th = min(th, 256)
    else:
        th = max(int(row_tile), 1)
    th = min(th, Ho2)
    n_tiles = pl.cdiv(Ho2, th)
    Ho2_pad = n_tiles * th
    hwin = (th + halo) * W
    L1 = (th + 2) * W

    if pack == 9:
        offs1 = (0,)
    elif pack == 3:
        offs1 = (0, W, 2 * W)
    else:
        offs1 = tuple(di * W + dj for di in range(3) for dj in range(3))

    # ---- operand prep: NCHW -> NHWC, tail-row pad, tap packing, lane pad ---
    x = jnp.transpose(x_nchw, (0, 2, 3, 1))
    pad_r = max(0, Ho2_pad + halo - H)
    if pad_r:
        x = jnp.pad(x, ((0, 0), (0, pad_r), (0, 0), (0, 0)))
    Hp = H + pad_r
    x = _pack_input(x, pack)
    x = jnp.pad(x, ((0, 0), (0, 0), (0, 0), (0, K1p - x.shape[-1])))
    x = x.astype(compute_dtype).reshape(N, Hp * W, K1p)      # 2-D DMA slices

    w1 = _prep_weights(params["w1"], pack, K1p, C1p, compute_dtype)
    s1, b1 = fold_bn(params["b1"], params["gamma1"], params["beta1"],
                     params["mean1"], params["var1"])
    s1 = jnp.pad(s1, (0, C1p - Cout)).reshape(1, C1p).astype(jnp.float32)
    b1 = jnp.pad(b1, (0, C1p - Cout)).reshape(1, C1p).astype(jnp.float32)

    w2 = _prep_weights(params["w2"], 1, C1p, C2p, compute_dtype)
    s2, b2 = fold_bn(params["b2"], params["gamma2"], params["beta2"],
                     params["mean2"], params["var2"])
    s2 = jnp.pad(s2, (0, C2p - Cout)).reshape(1, C2p).astype(jnp.float32)
    b2 = jnp.pad(b2, (0, C2p - Cout)).reshape(1, C2p).astype(jnp.float32)

    flops = 2 * N * n_tiles * (n_mm1 * L1 * K1p * C1p + 9 * th * W * C1p * C2p)
    bytes_accessed = (N * n_tiles * hwin * K1p * in_item
                      + (w1.size + w2.size) * in_item
                      + N * Ho2_pad * W * C2p * out_item)
    vmem_limit = int(min(max(32 * 1024 * 1024, 2 * (fixed + per_row * th)),
                         120 * 1024 * 1024))

    kernel = functools.partial(_fused_unet_conv2_kernel, W=W, hwin=hwin,
                               offs1=offs1, xbuf_slack=xbuf_slack)

    out_full = pl.pallas_call(
        kernel,
        out_shape=jax.ShapeDtypeStruct((N, Ho2_pad, W, C2p), compute_dtype),
        grid=(N, n_tiles),
        in_specs=[
            pl.BlockSpec(memory_space=pl.ANY),                        # x in HBM
            pl.BlockSpec((n_mm1, K1p, C1p), lambda n, t: (0, 0, 0)),
            pl.BlockSpec((1, C1p), lambda n, t: (0, 0)),
            pl.BlockSpec((1, C1p), lambda n, t: (0, 0)),
            pl.BlockSpec((9, C1p, C2p), lambda n, t: (0, 0, 0)),
            pl.BlockSpec((1, C2p), lambda n, t: (0, 0)),
            pl.BlockSpec((1, C2p), lambda n, t: (0, 0)),
        ],
        out_specs=pl.BlockSpec((1, th, W, C2p), lambda n, t: (n, t, 0, 0)),
        scratch_shapes=[
            pltpu.VMEM((2, hwin + xbuf_slack, K1p), compute_dtype),
            pltpu.VMEM((L1 + 8, C1p), h1_dtype),
            pltpu.SemaphoreType.DMA((2,)),
        ],
        compiler_params=pltpu.CompilerParams(
            # Row-tile axis must be "arbitrary": the cross-step input prefetch
            # relies on sequential tile order on each core.
            dimension_semantics=("parallel", "arbitrary"),
            vmem_limit_bytes=vmem_limit),
        cost_estimate=pl.CostEstimate(flops=flops, transcendentals=0,
                                      bytes_accessed=bytes_accessed),
    )(x, w1, s1, b1, w2, s2, b2)

    out = out_full[:, :Ho2, :Wo2, :Cout]       # drop padded rows/cols/lanes
    return jnp.transpose(out, (0, 3, 1, 2))    # NHWC -> NCHW


def _reference_forward(x_nchw, params, eps=1e-5):
    """Pure-JAX reference (lax conv) mirroring PyTorch eval-mode semantics."""
    def stage(x, w, b, gamma, beta, mean, var):
        y = jax.lax.conv_general_dilated(
            x, w, window_strides=(1, 1), padding="VALID",
            dimension_numbers=("NCHW", "OIHW", "NCHW"))
        y = y + b.reshape(1, -1, 1, 1)
        y = (y - mean.reshape(1, -1, 1, 1)) / jnp.sqrt(
            var.reshape(1, -1, 1, 1) + eps)
        y = y * gamma.reshape(1, -1, 1, 1) + beta.reshape(1, -1, 1, 1)
        return jnp.maximum(y, 0.0)

    y = stage(x_nchw, params["w1"], params["b1"], params["gamma1"],
              params["beta1"], params["mean1"], params["var1"])
    y = stage(y, params["w2"], params["b2"], params["gamma2"],
              params["beta2"], params["mean2"], params["var2"])
    return y


def init_params(key, in_size, out_size):
    ks = jax.random.split(key, 8)
    p = {}
    p["w1"] = 0.1 * jax.random.normal(ks[0], (out_size, in_size, 3, 3),
                                      jnp.float32)
    p["b1"] = 0.05 * jax.random.normal(ks[1], (out_size,), jnp.float32)
    p["gamma1"] = 1.0 + 0.1 * jax.random.normal(ks[2], (out_size,), jnp.float32)
    p["beta1"] = 0.05 * jax.random.normal(ks[3], (out_size,), jnp.float32)
    p["mean1"] = 0.02 * jax.random.normal(ks[4], (out_size,), jnp.float32)
    p["var1"] = 0.5 + jax.random.uniform(ks[5], (out_size,), jnp.float32)

    p["w2"] = 0.1 * jax.random.normal(ks[6], (out_size, out_size, 3, 3),
                                      jnp.float32)
    p["b2"] = 0.05 * jax.random.normal(ks[7], (out_size,), jnp.float32)
    k2 = jax.random.split(ks[7], 4)
    p["gamma2"] = 1.0 + 0.1 * jax.random.normal(k2[0], (out_size,), jnp.float32)
    p["beta2"] = 0.05 * jax.random.normal(k2[1], (out_size,), jnp.float32)
    p["mean2"] = 0.02 * jax.random.normal(k2[2], (out_size,), jnp.float32)
    p["var2"] = 0.5 + jax.random.uniform(k2[3], (out_size,), jnp.float32)
    return p


if __name__ == "__main__":
    key = jax.random.PRNGKey(0)
    kx, kp = jax.random.split(key)

    N, Cin, Cout, H, W = 2, 4, 16, 16, 16
    N, Cin, Cout, H, W = 2, 4, 8, 16, 16
    x = jax.random.normal(kx, (N, Cin, H, W), jnp.float32)
    params = init_params(kp, Cin, Cout)

    ref = _reference_forward(x, params)

    # f32 operands, 3 row tiles (exercises the double-buffered halo DMA and
    # the zero-padded tail tile of the cdiv grid).
    out = jax.block_until_ready(
        unet_conv2_forward(x, params, row_tile=5, compute_dtype=jnp.float32))
    assert out.shape == (N, Cout, H - 4, W - 4), out.shape
    err = float(jnp.max(jnp.abs(out - ref)))
    assert err < 1e-4, err

    # Default path: bf16 operands + bf16 stage-1 activation, auto row tile.
    out_bf16 = jax.block_until_ready(unet_conv2_forward(x, params))
    assert out_bf16.shape == (N, Cout, H - 4, W - 4), out_bf16.shape
    err_bf16 = float(jnp.max(jnp.abs(out_bf16.astype(jnp.float32) - ref)))
    assert err_bf16 < 2e-1, err_bf16

    print("KERNEL_OK")
</pallas_src>

<mosaic_0001>
module attributes {stable_mosaic.version = 11 : i64} {
  func.func @_fused_unet_conv2_kernel(%arg0: i32, %arg1: i32, %arg2: memref<2x272x128xf32, #tpu.memory_space<any>>, %arg3: memref<1x128x128xf32, #tpu.memory_space<vmem>>, %arg4: memref<1x128xf32, #tpu.memory_space<vmem>>, %arg5: memref<1x128xf32, #tpu.memory_space<vmem>>, %arg6: memref<9x128x128xf32, #tpu.memory_space<vmem>>, %arg7: memref<1x128xf32, #tpu.memory_space<vmem>>, %arg8: memref<1x128xf32, #tpu.memory_space<vmem>>, %arg9: memref<1x5x16x128xf32, #tpu.memory_space<vmem>>, %arg10: memref<2x112x128xf32, #tpu.memory_space<vmem>>, %arg11: memref<120x128xf32, #tpu.memory_space<vmem>>, %arg12: memref<2x!tpu.dma_semaphore, #tpu.memory_space<semaphore_mem>>) attributes {dimension_semantics = [#tpu.dimension_semantics<parallel>, #tpu.dimension_semantics<arbitrary>], iteration_bounds = array<i64: 2, 3>, scalar_prefetch = 0 : i64, scratch_operands = 3 : i64, tpu.core_type = #tpu.core_type<tc>, window_params = [{}, {pipeline_mode = #tpu.pipeline_mode<synchronous>, transform_indices = @transform_1, window_bounds = array<i64: 1, 128, 128>}, {pipeline_mode = #tpu.pipeline_mode<synchronous>, transform_indices = @transform_2, window_bounds = array<i64: 1, 128>}, {pipeline_mode = #tpu.pipeline_mode<synchronous>, transform_indices = @transform_3, window_bounds = array<i64: 1, 128>}, {pipeline_mode = #tpu.pipeline_mode<synchronous>, transform_indices = @transform_4, window_bounds = array<i64: 9, 128, 128>}, {pipeline_mode = #tpu.pipeline_mode<synchronous>, transform_indices = @transform_5, window_bounds = array<i64: 1, 128>}, {pipeline_mode = #tpu.pipeline_mode<synchronous>, transform_indices = @transform_6, window_bounds = array<i64: 1, 128>}, {transform_indices = @transform_7, window_bounds = array<i64: 1, 5, 16, 128>}]} {
    %c2_i32 = arith.constant 2 : i32
    %c0_i32 = arith.constant 0 : i32
    %0 = arith.cmpi eq, %c2_i32, %c0_i32 : i32
    %c1_i32 = arith.constant 1 : i32
    %1 = arith.select %0, %c1_i32, %c2_i32 : i32
    %2 = arith.remsi %arg1, %1 : i32
    %c0_i32_0 = arith.constant 0 : i32
    %3 = arith.cmpi ne, %2, %c0_i32_0 : i32
    %c0_i32_1 = arith.constant 0 : i32
    %4 = arith.cmpi slt, %2, %c0_i32_1 : i32
    %c0_i32_2 = arith.constant 0 : i32
    %5 = arith.cmpi slt, %1, %c0_i32_2 : i32
    %6 = arith.xori %4, %5 : i1
    %7 = arith.andi %6, %3 : i1
    %8 = arith.addi %2, %1 : i32
    %9 = arith.select %7, %8, %2 : i32
    %c0_i32_3 = arith.constant 0 : i32
    %10 = arith.cmpi eq, %arg1, %c0_i32_3 : i32
    %11 = arith.extui %10 : i1 to i32
    %c0_i32_4 = arith.constant 0 : i32
    %12 = arith.cmpi ne, %11, %c0_i32_4 : i32
    scf.if %12 {
      %c0_i32_72 = arith.constant 0 : i32
      %c0_i32_73 = arith.constant 0 : i32
      %c0_i32_74 = arith.constant 0 : i32
      %c0_i32_75 = arith.constant 0 : i32
      %95 = tpu.memref_slice %arg2[%arg0, %c0_i32_74, %c0_i32_75] : memref<2x272x128xf32, #tpu.memory_space<any>> -> memref<1x112x128xf32, #tpu.memory_space<any>>
      %96 = tpu.memref_squeeze %95 : memref<1x112x128xf32, #tpu.memory_space<any>> -> memref<112x128xf32, #tpu.memory_space<any>>
      %c0_i32_76 = arith.constant 0 : i32
      %c0_i32_77 = arith.constant 0 : i32
      %97 = tpu.memref_slice %arg10[%c0_i32_72, %c0_i32_76, %c0_i32_77] : memref<2x112x128xf32, #tpu.memory_space<vmem>> -> memref<1x112x128xf32, #tpu.memory_space<vmem>>
      %98 = tpu.memref_squeeze %97 : memref<1x112x128xf32, #tpu.memory_space<vmem>> -> memref<112x128xf32, #tpu.memory_space<vmem>>
      %99 = tpu.memref_slice %arg12[%c0_i32_73] : memref<2x!tpu.dma_semaphore, #tpu.memory_space<semaphore_mem>> -> memref<1x!tpu.dma_semaphore, #tpu.memory_space<semaphore_mem>>
      %100 = tpu.memref_squeeze %99 : memref<1x!tpu.dma_semaphore, #tpu.memory_space<semaphore_mem>> -> memref<!tpu.dma_semaphore, #tpu.memory_space<semaphore_mem>>
      tpu.enqueue_dma source(%96 : memref<112x128xf32, #tpu.memory_space<any>>) target(%98 : memref<112x128xf32, #tpu.memory_space<vmem>>) target_semaphore(%100 : memref<!tpu.dma_semaphore, #tpu.memory_space<semaphore_mem>>)
    } else {
    }
    %c1_i32_5 = arith.constant 1 : i32
    %13 = arith.addi %arg1, %c1_i32_5 : i32
    %c3_i32 = arith.constant 3 : i32
    %14 = arith.cmpi slt, %13, %c3_i32 : i32
    %15 = arith.extui %14 : i1 to i32
    %c0_i32_6 = arith.constant 0 : i32
    %16 = arith.cmpi ne, %15, %c0_i32_6 : i32
    scf.if %16 {
      %c1_i32_72 = arith.constant 1 : i32
      %95 = arith.addi %arg1, %c1_i32_72 : i32
      %c1_i32_73 = arith.constant 1 : i32
      %96 = arith.subi %c1_i32_73, %9 : i32
      %c80_i32_74 = arith.constant 80 : i32
      %97 = arith.muli %95, %c80_i32_74 : i32
      %c0_i32_75 = arith.constant 0 : i32
      %98 = tpu.memref_slice %arg2[%arg0, %97, %c0_i32_75] : memref<2x272x128xf32, #tpu.memory_space<any>> -> memref<1x112x128xf32, #tpu.memory_space<any>>
      %99 = tpu.memref_squeeze %98 : memref<1x112x128xf32, #tpu.memory_space<any>> -> memref<112x128xf32, #tpu.memory_space<any>>
      %c0_i32_76 = arith.constant 0 : i32
      %c0_i32_77 = arith.constant 0 : i32
      %100 = tpu.memref_slice %arg10[%96, %c0_i32_76, %c0_i32_77] : memref<2x112x128xf32, #tpu.memory_space<vmem>> -> memref<1x112x128xf32, #tpu.memory_space<vmem>>
      %101 = tpu.memref_squeeze %100 : memref<1x112x128xf32, #tpu.memory_space<vmem>> -> memref<112x128xf32, #tpu.memory_space<vmem>>
      %102 = tpu.memref_slice %arg12[%96] : memref<2x!tpu.dma_semaphore, #tpu.memory_space<semaphore_mem>> -> memref<1x!tpu.dma_semaphore, #tpu.memory_space<semaphore_mem>>
      %103 = tpu.memref_squeeze %102 : memref<1x!tpu.dma_semaphore, #tpu.memory_space<semaphore_mem>> -> memref<!tpu.dma_semaphore, #tpu.memory_space<semaphore_mem>>
      tpu.enqueue_dma source(%99 : memref<112x128xf32, #tpu.memory_space<any>>) target(%101 : memref<112x128xf32, #tpu.memory_space<vmem>>) target_semaphore(%103 : memref<!tpu.dma_semaphore, #tpu.memory_space<semaphore_mem>>)
    } else {
    }
    %c80_i32 = arith.constant 80 : i32
    %17 = arith.muli %arg1, %c80_i32 : i32
    %c0_i32_7 = arith.constant 0 : i32
    %18 = tpu.memref_slice %arg2[%arg0, %17, %c0_i32_7] : memref<2x272x128xf32, #tpu.memory_space<any>> -> memref<1x112x128xf32, #tpu.memory_space<any>>
    %19 = tpu.memref_squeeze %18 : memref<1x112x128xf32, #tpu.memory_space<any>> -> memref<112x128xf32, #tpu.memory_space<any>>
    %c0_i32_8 = arith.constant 0 : i32
    %c0_i32_9 = arith.constant 0 : i32
    %20 = tpu.memref_slice %arg10[%9, %c0_i32_8, %c0_i32_9] : memref<2x112x128xf32, #tpu.memory_space<vmem>> -> memref<1x112x128xf32, #tpu.memory_space<vmem>>
    %21 = tpu.memref_squeeze %20 : memref<1x112x128xf32, #tpu.memory_space<vmem>> -> memref<112x128xf32, #tpu.memory_space<vmem>>
    %22 = tpu.memref_slice %arg12[%9] : memref<2x!tpu.dma_semaphore, #tpu.memory_space<semaphore_mem>> -> memref<1x!tpu.dma_semaphore, #tpu.memory_space<semaphore_mem>>
    %23 = tpu.memref_squeeze %22 : memref<1x!tpu.dma_semaphore, #tpu.memory_space<semaphore_mem>> -> memref<!tpu.dma_semaphore, #tpu.memory_space<semaphore_mem>>
    tpu.wait_dma2 semaphore(%23 : memref<!tpu.dma_semaphore, #tpu.memory_space<semaphore_mem>>) src(%19 : memref<112x128xf32, #tpu.memory_space<any>>) dst(%21 : memref<112x128xf32, #tpu.memory_space<vmem>>)
    %24 = arith.index_cast %9 : i32 to index
    %c0 = arith.constant 0 : index
    %c0_10 = arith.constant 0 : index
    %25 = vector.load %arg10[%24, %c0, %c0_10] : memref<2x112x128xf32, #tpu.memory_space<vmem>>, vector<1x112x128xf32>
    %26 = vector.shape_cast %25 : vector<1x112x128xf32> to vector<112x128xf32>
    %c0_11 = arith.constant 0 : index
    %c0_12 = arith.constant 0 : index
    %c0_13 = arith.constant 0 : index
    %27 = vector.load %arg3[%c0_11, %c0_12, %c0_13] : memref<1x128x128xf32, #tpu.memory_space<vmem>>, vector<1x128x128xf32>
    %28 = vector.shape_cast %27 : vector<1x128x128xf32> to vector<128x128xf32>
    %cst = arith.constant dense<0.000000e+00> : vector<112x128xf32>
    %29 = tpu.matmul %26, %28, %cst {dimension_numbers = #tpu.dot_dimension_numbers<[1], [0], [0], [1], [0, 0, 1, 1], [], []>} : vector<112x128xf32>, vector<128x128xf32>, vector<112x128xf32> -> vector<112x128xf32>
    %c0_14 = arith.constant 0 : index
    %c0_15 = arith.constant 0 : index
    %30 = vector.load %arg4[%c0_14, %c0_15] : memref<1x128xf32, #tpu.memory_space<vmem>>, vector<1x128xf32>
    %31 = vector.broadcast %30 : vector<1x128xf32> to vector<112x128xf32>
    %32 = arith.mulf %29, %31 : vector<112x128xf32>
    %c0_16 = arith.constant 0 : index
    %c0_17 = arith.constant 0 : index
    %33 = vector.load %arg5[%c0_16, %c0_17] : memref<1x128xf32, #tpu.memory_space<vmem>>, vector<1x128xf32>
    %34 = vector.broadcast %33 : vector<1x128xf32> to vector<112x128xf32>
    %35 = arith.addf %32, %34 : vector<112x128xf32>
    %cst_18 = arith.constant 0.000000e+00 : f32
    %36 = vector.broadcast %cst_18 : f32 to vector<112x128xf32>
    %37 = arith.maximumf %35, %36 : vector<112x128xf32>
    %c0_19 = arith.constant 0 : index
    %c0_20 = arith.constant 0 : index
    %38 = vector.load %arg11[%c0_19, %c0_20] : memref<120x128xf32, #tpu.memory_space<vmem>>, vector<112x128xf32>
    tpu.vector_store %arg11[%c0_19, %c0_20], %37 {strides = array<i32>} : memref<120x128xf32, #tpu.memory_space<vmem>>, vector<112x128xf32>,
    %cst_21 = arith.constant 0.000000e+00 : f32
    %39 = vector.broadcast %cst_21 : f32 to vector<8x128xf32>
    %c112 = arith.constant 112 : index
    %c0_22 = arith.constant 0 : index
    %40 = vector.load %arg11[%c112, %c0_22] : memref<120x128xf32, #tpu.memory_space<vmem>>, vector<8x128xf32>
    tpu.vector_store %arg11[%c112, %c0_22], %39 {strides = array<i32>} : memref<120x128xf32, #tpu.memory_space<vmem>>, vector<8x128xf32>,
    %c0_23 = arith.constant 0 : index
    %c0_24 = arith.constant 0 : index
    %41 = vector.load %arg11[%c0_23, %c0_24] : memref<120x128xf32, #tpu.memory_space<vmem>>, vector<80x128xf32>
    %c0_25 = arith.constant 0 : index
    %c0_26 = arith.constant 0 : index
    %c0_27 = arith.constant 0 : index
    %42 = vector.load %arg6[%c0_25, %c0_26, %c0_27] : memref<9x128x128xf32, #tpu.memory_space<vmem>>, vector<1x128x128xf32>
    %43 = vector.shape_cast %42 : vector<1x128x128xf32> to vector<128x128xf32>
    %cst_28 = arith.constant dense<0.000000e+00> : vector<80x128xf32>
    %44 = tpu.matmul %41, %43, %cst_28 {dimension_numbers = #tpu.dot_dimension_numbers<[1], [0], [0], [1], [0, 0, 1, 1], [], []>} : vector<80x128xf32>, vector<128x128xf32>, vector<80x128xf32> -> vector<80x128xf32>
    %c1 = arith.constant 1 : index
    %c0_29 = arith.constant 0 : index
    %45 = vector.load %arg11[%c1, %c0_29] : memref<120x128xf32, #tpu.memory_space<vmem>>, vector<80x128xf32>
    %c1_30 = arith.constant 1 : index
    %c0_31 = arith.constant 0 : index
    %c0_32 = arith.constant 0 : index
    %46 = vector.load %arg6[%c1_30, %c0_31, %c0_32] : memref<9x128x128xf32, #tpu.memory_space<vmem>>, vector<1x128x128xf32>
    %47 = vector.shape_cast %46 : vector<1x128x128xf32> to vector<128x128xf32>
    %cst_33 = arith.constant dense<0.000000e+00> : vector<80x128xf32>
    %48 = tpu.matmul %45, %47, %cst_33 {dimension_numbers = #tpu.dot_dimension_numbers<[1], [0], [0], [1], [0, 0, 1, 1], [], []>} : vector<80x128xf32>, vector<128x128xf32>, vector<80x128xf32> -> vector<80x128xf32>
    %49 = arith.addf %44, %48 : vector<80x128xf32>
    %c2 = arith.constant 2 : index
    %c0_34 = arith.constant 0 : index
    %50 = vector.load %arg11[%c2, %c0_34] : memref<120x128xf32, #tpu.memory_space<vmem>>, vector<80x128xf32>
    %c2_35 = arith.constant 2 : index
    %c0_36 = arith.constant 0 : index
    %c0_37 = arith.constant 0 : index
    %51 = vector.load %arg6[%c2_35, %c0_36, %c0_37] : memref<9x128x128xf32, #tpu.memory_space<vmem>>, vector<1x128x128xf32>
    %52 = vector.shape_cast %51 : vector<1x128x128xf32> to vector<128x128xf32>
    %cst_38 = arith.constant dense<0.000000e+00> : vector<80x128xf32>
    %53 = tpu.matmul %50, %52, %cst_38 {dimension_numbers = #tpu.dot_dimension_numbers<[1], [0], [0], [1], [0, 0, 1, 1], [], []>} : vector<80x128xf32>, vector<128x128xf32>, vector<80x128xf32> -> vector<80x128xf32>
    %54 = arith.addf %49, %53 : vector<80x128xf32>
    %c16 = arith.constant 16 : index
    %c0_39 = arith.constant 0 : index
    %55 = vector.load %arg11[%c16, %c0_39] : memref<120x128xf32, #tpu.memory_space<vmem>>, vector<80x128xf32>
    %c3 = arith.constant 3 : index
    %c0_40 = arith.constant 0 : index
    %c0_41 = arith.constant 0 : index
    %56 = vector.load %arg6[%c3, %c0_40, %c0_41] : memref<9x128x128xf32, #tpu.memory_space<vmem>>, vector<1x128x128xf32>
    %57 = vector.shape_cast %56 : vector<1x128x128xf32> to vector<128x128xf32>
    %cst_42 = arith.constant dense<0.000000e+00> : vector<80x128xf32>
    %58 = tpu.matmul %55, %57, %cst_42 {dimension_numbers = #tpu.dot_dimension_numbers<[1], [0], [0], [1], [0, 0, 1, 1], [], []>} : vector<80x128xf32>, vector<128x128xf32>, vector<80x128xf32> -> vector<80x128xf32>
    %59 = arith.addf %54, %58 : vector<80x128xf32>
    %c17 = arith.constant 17 : index
    %c0_43 = arith.constant 0 : index
    %60 = vector.load %arg11[%c17, %c0_43] : memref<120x128xf32, #tpu.memory_space<vmem>>, vector<80x128xf32>
    %c4 = arith.constant 4 : index
    %c0_44 = arith.constant 0 : index
    %c0_45 = arith.constant 0 : index
    %61 = vector.load %arg6[%c4, %c0_44, %c0_45] : memref<9x128x128xf32, #tpu.memory_space<vmem>>, vector<1x128x128xf32>
    %62 = vector.shape_cast %61 : vector<1x128x128xf32> to vector<128x128xf32>
    %cst_46 = arith.constant dense<0.000000e+00> : vector<80x128xf32>
    %63 = tpu.matmul %60, %62, %cst_46 {dimension_numbers = #tpu.dot_dimension_numbers<[1], [0], [0], [1], [0, 0, 1, 1], [], []>} : vector<80x128xf32>, vector<128x128xf32>, vector<80x128xf32> -> vector<80x128xf32>
    %64 = arith.addf %59, %63 : vector<80x128xf32>
    %c18 = arith.constant 18 : index
    %c0_47 = arith.constant 0 : index
    %65 = vector.load %arg11[%c18, %c0_47] : memref<120x128xf32, #tpu.memory_space<vmem>>, vector<80x128xf32>
    %c5 = arith.constant 5 : index
    %c0_48 = arith.constant 0 : index
    %c0_49 = arith.constant 0 : index
    %66 = vector.load %arg6[%c5, %c0_48, %c0_49] : memref<9x128x128xf32, #tpu.memory_space<vmem>>, vector<1x128x128xf32>
    %67 = vector.shape_cast %66 : vector<1x128x128xf32> to vector<128x128xf32>
    %cst_50 = arith.constant dense<0.000000e+00> : vector<80x128xf32>
    %68 = tpu.matmul %65, %67, %cst_50 {dimension_numbers = #tpu.dot_dimension_numbers<[1], [0], [0], [1], [0, 0, 1, 1], [], []>} : vector<80x128xf32>, vector<128x128xf32>, vector<80x128xf32> -> vector<80x128xf32>
    %69 = arith.addf %64, %68 : vector<80x128xf32>
    %c32 = arith.constant 32 : index
    %c0_51 = arith.constant 0 : index
    %70 = vector.load %arg11[%c32, %c0_51] : memref<120x128xf32, #tpu.memory_space<vmem>>, vector<80x128xf32>
    %c6 = arith.constant 6 : index
    %c0_52 = arith.constant 0 : index
    %c0_53 = arith.constant 0 : index
    %71 = vector.load %arg6[%c6, %c0_52, %c0_53] : memref<9x128x128xf32, #tpu.memory_space<vmem>>, vector<1x128x128xf32>
    %72 = vector.shape_cast %71 : vector<1x128x128xf32> to vector<128x128xf32>
    %cst_54 = arith.constant dense<0.000000e+00> : vector<80x128xf32>
    %73 = tpu.matmul %70, %72, %cst_54 {dimension_numbers = #tpu.dot_dimension_numbers<[1], [0], [0], [1], [0, 0, 1, 1], [], []>} : vector<80x128xf32>, vector<128x128xf32>, vector<80x128xf32> -> vector<80x128xf32>
    %74 = arith.addf %69, %73 : vector<80x128xf32>
    %c33 = arith.constant 33 : index
    %c0_55 = arith.constant 0 : index
    %75 = vector.load %arg11[%c33, %c0_55] : memref<120x128xf32, #tpu.memory_space<vmem>>, vector<80x128xf32>
    %c7 = arith.constant 7 : index
    %c0_56 = arith.constant 0 : index
    %c0_57 = arith.constant 0 : index
    %76 = vector.load %arg6[%c7, %c0_56, %c0_57] : memref<9x128x128xf32, #tpu.memory_space<vmem>>, vector<1x128x128xf32>
    %77 = vector.shape_cast %76 : vector<1x128x128xf32> to vector<128x128xf32>
    %cst_58 = arith.constant dense<0.000000e+00> : vector<80x128xf32>
    %78 = tpu.matmul %75, %77, %cst_58 {dimension_numbers = #tpu.dot_dimension_numbers<[1], [0], [0], [1], [0, 0, 1, 1], [], []>} : vector<80x128xf32>, vector<128x128xf32>, vector<80x128xf32> -> vector<80x128xf32>
    %79 = arith.addf %74, %78 : vector<80x128xf32>
    %c34 = arith.constant 34 : index
    %c0_59 = arith.constant 0 : index
    %80 = vector.load %arg11[%c34, %c0_59] : memref<120x128xf32, #tpu.memory_space<vmem>>, vector<80x128xf32>
    %c8 = arith.constant 8 : index
    %c0_60 = arith.constant 0 : index
    %c0_61 = arith.constant 0 : index
    %81 = vector.load %arg6[%c8, %c0_60, %c0_61] : memref<9x128x128xf32, #tpu.memory_space<vmem>>, vector<1x128x128xf32>
    %82 = vector.shape_cast %81 : vector<1x128x128xf32> to vector<128x128xf32>
    %cst_62 = arith.constant dense<0.000000e+00> : vector<80x128xf32>
    %83 = tpu.matmul %80, %82, %cst_62 {dimension_numbers = #tpu.dot_dimension_numbers<[1], [0], [0], [1], [0, 0, 1, 1], [], []>} : vector<80x128xf32>, vector<128x128xf32>, vector<80x128xf32> -> vector<80x128xf32>
    %84 = arith.addf %79, %83 : vector<80x128xf32>
    %c0_63 = arith.constant 0 : index
    %c0_64 = arith.constant 0 : index
    %85 = vector.load %arg7[%c0_63, %c0_64] : memref<1x128xf32, #tpu.memory_space<vmem>>, vector<1x128xf32>
    %86 = vector.broadcast %85 : vector<1x128xf32> to vector<80x128xf32>
    %87 = arith.mulf %84, %86 : vector<80x128xf32>
    %c0_65 = arith.constant 0 : index
    %c0_66 = arith.constant 0 : index
    %88 = vector.load %arg8[%c0_65, %c0_66] : memref<1x128xf32, #tpu.memory_space<vmem>>, vector<1x128xf32>
    %89 = vector.broadcast %88 : vector<1x128xf32> to vector<80x128xf32>
    %90 = arith.addf %87, %89 : vector<80x128xf32>
    %cst_67 = arith.constant 0.000000e+00 : f32
    %91 = vector.broadcast %cst_67 : f32 to vector<80x128xf32>
    %92 = arith.maximumf %90, %91 : vector<80x128xf32>
    %93 = vector.shape_cast %92 : vector<80x128xf32> to vector<1x5x16x128xf32>
    %c0_68 = arith.constant 0 : index
    %c0_69 = arith.constant 0 : index
    %c0_70 = arith.constant 0 : index
    %c0_71 = arith.constant 0 : index
    %94 = vector.load %arg9[%c0_68, %c0_69, %c0_70, %c0_71] : memref<1x5x16x128xf32, #tpu.memory_space<vmem>>, vector<1x5x16x128xf32>
    tpu.vector_store %arg9[%c0_68, %c0_69, %c0_70, %c0_71], %93 {strides = array<i32>} : memref<1x5x16x128xf32, #tpu.memory_space<vmem>>, vector<1x5x16x128xf32>,
    return
  }
  func.func @transform_1(%arg0: i32, %arg1: i32) -> (i32, i32, i32) {
    %c0_i32 = arith.constant 0 : i32
    %c0_i32_0 = arith.constant 0 : i32
    %c0_i32_1 = arith.constant 0 : i32
    %c0_i32_2 = arith.constant 0 : i32
    return %c0_i32, %c0_i32_0, %c0_i32_1 : i32, i32, i32
  }
  func.func @transform_2(%arg0: i32, %arg1: i32) -> (i32, i32) {
    %c0_i32 = arith.constant 0 : i32
    %c0_i32_0 = arith.constant 0 : i32
    %c0_i32_1 = arith.constant 0 : i32
    return %c0_i32, %c0_i32_0 : i32, i32
  }
  func.func @transform_3(%arg0: i32, %arg1: i32) -> (i32, i32) {
    %c0_i32 = arith.constant 0 : i32
    %c0_i32_0 = arith.constant 0 : i32
    %c0_i32_1 = arith.constant 0 : i32
    return %c0_i32, %c0_i32_0 : i32, i32
  }
  func.func @transform_4(%arg0: i32, %arg1: i32) -> (i32, i32, i32) {
    %c0_i32 = arith.constant 0 : i32
    %c0_i32_0 = arith.constant 0 : i32
    %c0_i32_1 = arith.constant 0 : i32
    %c0_i32_2 = arith.constant 0 : i32
    return %c0_i32, %c0_i32_0, %c0_i32_1 : i32, i32, i32
  }
  func.func @transform_5(%arg0: i32, %arg1: i32) -> (i32, i32) {
    %c0_i32 = arith.constant 0 : i32
    %c0_i32_0 = arith.constant 0 : i32
    %c0_i32_1 = arith.constant 0 : i32
    return %c0_i32, %c0_i32_0 : i32, i32
  }
  func.func @transform_6(%arg0: i32, %arg1: i32) -> (i32, i32) {
    %c0_i32 = arith.constant 0 : i32
    %c0_i32_0 = arith.constant 0 : i32
    %c0_i32_1 = arith.constant 0 : i32
    return %c0_i32, %c0_i32_0 : i32, i32
  }
  func.func @transform_7(%arg0: i32, %arg1: i32) -> (i32, i32, i32, i32) {
    %c0_i32 = arith.constant 0 : i32
    %c0_i32_0 = arith.constant 0 : i32
    %c0_i32_1 = arith.constant 0 : i32
    return %arg0, %arg1, %c0_i32, %c0_i32_0 : i32, i32, i32, i32
  }
}

</mosaic_0001>

<llo_original>
// kernel: tpu_custom_call.1
$region0: #{tpu_custom_call.1}
  #allocation0 [shape = 'u32[]', space=smem, size = 0x4, offset = 0x4, fixed_abs, tag = 'smem constant byte address 0x4 - core index']
  #allocation1 [shape = 'u32[144,128]{1,0:T(1,128)}', space=vmem, size = 0x12000, scoped, tag = 'internal scratch']
  #allocation2 [shape = 'f32[2,112,128]{2,1,0:T(8,128)}', space=vmem, size = 0x1c000, scoped, tag = 'scratch operand']
  #allocation3 [shape = 'f32[120,128]{1,0:T(8,128)}', space=vmem, size = 0xf000, scoped, tag = 'scratch operand']
  #allocation4 [shape = 's32[2]{0}', space=sflag, size = 0x8, scoped, tag = 'scratch operand']
  #allocation11 [shape = 's32[]', space=sflag, size = 0x4, offset = 0, fixed_abs, tag = 'sflag constant byte address 0x0 - dummy sync flag']
  #allocation12 [shape = 's32[]', space=sflag, size = 0x4, offset = 0, fixed_abs, tag = 'sflag constant byte address 0x0 - dummy sync flag']
  #allocation13 [shape = 'u32[]', space=smem, size = 0x4, offset = 0x44, fixed_abs, tag = 'smem constant byte address 0x44 - assertion arg 0']
  #allocation14 [shape = 'u32[]', space=smem, size = 0x4, offset = 0x48, fixed_abs, tag = 'smem constant byte address 0x48 - assertion arg 1']
  #allocation15 [shape = 's32[]', space=sflag, size = 0x4, offset = 0, fixed_abs, tag = 'sflag constant byte address 0x0 - dummy sync flag']
  #allocation16 [shape = 's32[]', space=sflag, size = 0x4, offset = 0, fixed_abs, tag = 'sflag constant byte address 0x0 - dummy sync flag']
  %s0 = inlined_call_operand.hbm [shape: f32[2,272,128], index: 0, kind: input, shape index: {}]
  %s1 = inlined_call_operand.hbm [shape: f32[1,128,128], index: 1, kind: input, shape index: {}]
  %s2 = inlined_call_operand.vmem [shape: f32[1,128], index: 2, kind: input, shape index: {}]
  %s3 = inlined_call_operand.vmem [shape: f32[1,128], index: 3, kind: input, shape index: {}]
  %s4 = inlined_call_operand.hbm [shape: f32[9,128,128], index: 4, kind: input, shape index: {}]
  %s5 = inlined_call_operand.vmem [shape: f32[1,128], index: 5, kind: input, shape index: {}]
  %s6 = inlined_call_operand.vmem [shape: f32[1,128], index: 6, kind: input, shape index: {}]
  %s7 = inlined_call_operand.hbm [shape: f32[2,15,16,128], index: 7, kind: output, shape index: {}]
  %s8 = sld [smem:[#allocation0]]
  $region81: #{tpu_custom_call.1} parent=0
    _
  %s10 = ssub.s32 1, %s8
  %s11 = scalar_select 0, %s10, %s8
  $region1: #{tpu_custom_call.1} parent=0
    #allocation5 [shape = 'u8[65536]{0}', space=vmem, size = 0x10000, scoped, tag = 'input window, operand 1, single buffered']
    #allocation6 [shape = 's32[2]{0}', space=sflag, size = 0x8, scoped, tag = 'scoped memory for tpu_custom_call.1']
    #allocation7 [shape = 's32[2]{0}', space=sflag, size = 0x8, scoped, tag = 'scoped memory for tpu_custom_call.1']
    #allocation8 [shape = 'u8[589824]{0}', space=vmem, size = 0x90000, scoped, tag = 'input window, operand 4, single buffered']
    #allocation9 [shape = 's32[1]{0}', space=sflag, size = 0x4, scoped, tag = 'scoped memory for tpu_custom_call.1']
    #allocation10 [shape = 'u8[81920]{0}', space=vmem, size = 0x14000, scoped, tag = 'output window, operand 0']
    %12 = vsyncpa [#allocation6], 0
    %13 = vsyncpa [#allocation9], 0
    %14 = vsyncpa [#allocation7], 0
    %s15 = scalar_lea.sflag [#allocation7], 1
    %16 = vsyncpa %s15, 0
    loop: start=0, step=1, limit=8
    $region2: #{tpu_custom_call.1} parent=1 // loop_pre_header
      _
    $region3: #{tpu_custom_call.1} parent=1 // loop_header
      %s18 = sphi 0, %s22
      %p19 = scmp.ge.s32.totalorder %s18, 8
      %s25 = sphi 0, %s37
      %s26 = sphi 0, %s33
      %s27 = sphi 0, %s25
      %s28 = sphi 0, %s26
      %s29 = sphi 0, %s27
      %s30 = sphi 0, %s28
      %s38 = sphi 0, %s38
      %s40 = sphi 0, %s38
      %s41 = sphi 0, %s40
      %s55 = sphi 0, %s41
      %s59 = sphi 0, %s59
      %s61 = sphi 0, %s59
      %s62 = sphi 0, %s61
      %s76 = sphi 0, %s62
      %s80 = sphi 0, %s80
      %s82 = sphi 0, %s80
      %s83 = sphi 0, %s82
      %s97 = sphi 0, %s83
      %s101 = sphi 0, %s101
      %s103 = sphi 0, %s101
      %s104 = sphi 0, %s103
      %s118 = sphi 0, %s104
      %s122 = sphi 0, %s122
      %s124 = sphi 0, %s122
      %s125 = sphi 0, %s124
      %s139 = sphi 0, %s125
      %s143 = sphi 0, %s143
      %s145 = sphi 0, %s143
      %s146 = sphi 0, %s145
      %s160 = sphi 0, %s146
      %s168 = sphi 0, %s170
      %s171 = sphi 0, %s168
      %s172 = sphi 0, %s171
      %s188 = sphi 0, %s172
    $region4: #{tpu_custom_call.1} parent=1 // loop_header_branch
      %21 = sbr.rel (%p19) target = $region8
    $region5: #{tpu_custom_call.1} parent=1 // loop_body
      %s23 = ssub.s32 %s18, 1
      %s24 = ssub.s32 %s18, 2
      %s31 = sadd.s32 1, %s26
      %p32 = scmp.ge.s32.totalorder %s31, 3
      %s33 = scalar_select %p32, 0, %s31
      %s34 = sadd.s32 1, %s25
      %s35 = scalar_select %p32, %s34, %s25
      %p36 = scmp.ge.s32.totalorder %s35, 2
      %s37 = scalar_select %p36, 0, %s35
      %s39 = sadd.s32 %s38, 1
      %p42 = scmp.eq.s32.totalorder %s18, 5
      %p43 = scmp.ne.s32.totalorder %s38, %s40
      %p44 = scmp.eq.s32.totalorder %s18, 0
      %p45 = por %p43, %p44
      %p46 = scmp.ne.s32.totalorder %s38, %s40
      %p47 = scmp.eq.s32.totalorder %s23, 5
      %p48 = por %p46, %p47
      %p49 = scmp.ne.s32.totalorder %s40, %s41
      %p50 = scmp.eq.s32.totalorder %s23, 0
      %p51 = por %p49, %p50
      %p52 = scmp.ne.s32.totalorder %s40, %s41
      %p53 = scmp.eq.s32.totalorder %s24, 5
      %p54 = por %p52, %p53
      %p56 = scmp.ne.s32.totalorder %s41, %s55
      %p57 = scmp.eq.s32.totalorder %s24, 0
      %p58 = por %p56, %p57
      %s60 = sadd.s32 %s59, 1
      %p63 = scmp.eq.s32.totalorder %s18, 5
      %p64 = scmp.ne.s32.totalorder %s59, %s61
      %p65 = scmp.eq.s32.totalorder %s18, 0
      %p66 = por %p64, %p65
      %p67 = scmp.ne.s32.totalorder %s59, %s61
      %p68 = scmp.eq.s32.totalorder %s23, 5
      %p69 = por %p67, %p68
      %p70 = scmp.ne.s32.totalorder %s61, %s62
      %p71 = scmp.eq.s32.totalorder %s23, 0
      %p72 = por %p70, %p71
      %p73 = scmp.ne.s32.totalorder %s61, %s62
      %p74 = scmp.eq.s32.totalorder %s24, 5
      %p75 = por %p73, %p74
      %p77 = scmp.ne.s32.totalorder %s62, %s76
      %p78 = scmp.eq.s32.totalorder %s24, 0
      %p79 = por %p77, %p78
      %s81 = sadd.s32 %s80, 1
      %p84 = scmp.eq.s32.totalorder %s18, 5
      %p85 = scmp.ne.s32.totalorder %s80, %s82
      %p86 = scmp.eq.s32.totalorder %s18, 0
      %p87 = por %p85, %p86
      %p88 = scmp.ne.s32.totalorder %s80, %s82
      %p89 = scmp.eq.s32.totalorder %s23, 5
      %p90 = por %p88, %p89
      %p91 = scmp.ne.s32.totalorder %s82, %s83
      %p92 = scmp.eq.s32.totalorder %s23, 0
      %p93 = por %p91, %p92
      %p94 = scmp.ne.s32.totalorder %s82, %s83
      %p95 = scmp.eq.s32.totalorder %s24, 5
      %p96 = por %p94, %p95
      %p98 = scmp.ne.s32.totalorder %s83, %s97
      %p99 = scmp.eq.s32.totalorder %s24, 0
      %p100 = por %p98, %p99
      %s102 = sadd.s32 %s101, 1
      %p105 = scmp.eq.s32.totalorder %s18, 5
      %p106 = scmp.ne.s32.totalorder %s101, %s103
      %p107 = scmp.eq.s32.totalorder %s18, 0
      %p108 = por %p106, %p107
      %p109 = scmp.ne.s32.totalorder %s101, %s103
      %p110 = scmp.eq.s32.totalorder %s23, 5
      %p111 = por %p109, %p110
      %p112 = scmp.ne.s32.totalorder %s103, %s104
      %p113 = scmp.eq.s32.totalorder %s23, 0
      %p114 = por %p112, %p113
      %p115 = scmp.ne.s32.totalorder %s103, %s104
      %p116 = scmp.eq.s32.totalorder %s24, 5
      %p117 = por %p115, %p116
      %p119 = scmp.ne.s32.totalorder %s104, %s118
      %p120 = scmp.eq.s32.totalorder %s24, 0
      %p121 = por %p119, %p120
      %s123 = sadd.s32 %s122, 1
      %p126 = scmp.eq.s32.totalorder %s18, 5
      %p127 = scmp.ne.s32.totalorder %s122, %s124
      %p128 = scmp.eq.s32.totalorder %s18, 0
      %p129 = por %p127, %p128
      %p130 = scmp.ne.s32.totalorder %s122, %s124
      %p131 = scmp.eq.s32.totalorder %s23, 5
      %p132 = por %p130, %p131
      %p133 = scmp.ne.s32.totalorder %s124, %s125
      %p134 = scmp.eq.s32.totalorder %s23, 0
      %p135 = por %p133, %p134
      %p136 = scmp.ne.s32.totalorder %s124, %s125
      %p137 = scmp.eq.s32.totalorder %s24, 5
      %p138 = por %p136, %p137
      %p140 = scmp.ne.s32.totalorder %s125, %s139
      %p141 = scmp.eq.s32.totalorder %s24, 0
      %p142 = por %p140, %p141
      %s144 = sadd.s32 %s143, 1
      %p147 = scmp.eq.s32.totalorder %s18, 5
      %p148 = scmp.ne.s32.totalorder %s143, %s145
      %p149 = scmp.eq.s32.totalorder %s18, 0
      %p150 = por %p148, %p149
      %p151 = scmp.ne.s32.totalorder %s143, %s145
      %p152 = scmp.eq.s32.totalorder %s23, 5
      %p153 = por %p151, %p152
      %p154 = scmp.ne.s32.totalorder %s145, %s146
      %p155 = scmp.eq.s32.totalorder %s23, 0
      %p156 = por %p154, %p155
      %p157 = scmp.ne.s32.totalorder %s145, %s146
      %p158 = scmp.eq.s32.totalorder %s24, 5
      %p159 = por %p157, %p158
      %p161 = scmp.ne.s32.totalorder %s146, %s160
      %p162 = scmp.eq.s32.totalorder %s24, 0
      %p163 = por %p161, %p162
      %s164 = ssub.s32 %s25, %s37
      %s165 = ssub.s32 %s26, %s33
      %s166 = sor.u32 %s164, %s165
      %p167 = scmp.eq.s32.totalorder %s166, 0
      %s169 = sadd.s32 %s168, 1
      %s170 = scalar_select %p167, %s168, %s169
      %p173 = pneg %p167
      %p174 = scmp.eq.s32.totalorder %s18, 5
      %p175 = por %p173, %p174
      %p176 = scmp.ne.s32.totalorder %s168, %s171
      %p177 = scmp.eq.s32.totalorder %s18, 0
      %p178 = por %p176, %p177
      %p179 = scmp.ne.s32.totalorder %s168, %s171
      %p180 = scmp.eq.s32.totalorder %s23, 5
      %p181 = por %p179, %p180
      %p182 = scmp.ne.s32.totalorder %s171, %s172
      %p183 = scmp.eq.s32.totalorder %s23, 0
      %p184 = por %p182, %p183
      %p185 = scmp.ne.s32.totalorder %s171, %s172
      %p186 = scmp.eq.s32.totalorder %s24, 5
      %p187 = por %p185, %p186
      %p189 = scmp.ne.s32.totalorder %s172, %s188
      %p190 = scmp.eq.s32.totalorder %s24, 0
      %p191 = por %p189, %p190
      %p192 = scmp.le.s32.totalorder 1, %s18
      %p193 = scmp.lt.s32.totalorder %s18, 7
      %p194 = pnand %p192, %p193
      %p195 = pneg %p194
      // Predicated region
      $region9: #{tpu_custom_call.1} parent=5 // pred_check
        _
      $region10: #{tpu_custom_call.1} parent=5 // pred_check_branch
        %197 = sbr.rel (%p194) target = $region12
      $region11: #{tpu_custom_call.1} parent=5 // pred_region
        %s198 = ssub.s32 %s18, 1
        // Predicated region
        $region13: #{tpu_custom_call.1} parent=11 // pred_check
          %p199 = pneg %p51
        $region14: #{tpu_custom_call.1} parent=11 // pred_check_branch
          %201 = sbr.rel (%p199) target = $region16
        $region15: #{tpu_custom_call.1} parent=11 // pred_region
          %s203 = ssub.s32 2048, 2048
          %204 = vsyncadd [#allocation6], %s203
          %s205 = sshll.u32 [#allocation5], 4
          %s206 = int_to_ptr.vmem [resolvable:$true] %s205
          %211 = dma.hbm_to_vmem [thread:$0]  %s1, 2048, %s206, [#allocation6], 128, 128, 8
        $region16: #{tpu_custom_call.1} parent=11 // pred_fallthru
          _
        // Predicated region
        $region17: #{tpu_custom_call.1} parent=11 // pred_check
          %p212 = pneg %p72
        $region18: #{tpu_custom_call.1} parent=11 // pred_check_branch
          %214 = sbr.rel (%p212) target = $region20
        $region19: #{tpu_custom_call.1} parent=11 // pred_region
          _
        $region20: #{tpu_custom_call.1} parent=11 // pred_fallthru
          _
        // Predicated region
        $region21: #{tpu_custom_call.1} parent=11 // pred_check
          %p215 = pneg %p93
        $region22: #{tpu_custom_call.1} parent=11 // pred_check_branch
          %217 = sbr.rel (%p215) target = $region24
        $region23: #{tpu_custom_call.1} parent=11 // pred_region
          _
        $region24: #{tpu_custom_call.1} parent=11 // pred_fallthru
          _
        // Predicated region
        $region25: #{tpu_custom_call.1} parent=11 // pred_check
          %p218 = pneg %p114
        $region26: #{tpu_custom_call.1} parent=11 // pred_check_branch
          %220 = sbr.rel (%p218) target = $region28
        $region27: #{tpu_custom_call.1} parent=11 // pred_region
          %s222 = ssub.s32 18432, 18432
          %223 = vsyncadd [#allocation9], %s222
          %s224 = sshll.u32 [#allocation8], 4
          %s225 = int_to_ptr.vmem [resolvable:$true] %s224
          %230 = dma.hbm_to_vmem [thread:$0]  %s4, 18432, %s225, [#allocation9], 128, 128, 8
        $region28: #{tpu_custom_call.1} parent=11 // pred_fallthru
          _
        // Predicated region
        $region29: #{tpu_custom_call.1} parent=11 // pred_check
          %p231 = pneg %p135
        $region30: #{tpu_custom_call.1} parent=11 // pred_check_branch
          %233 = sbr.rel (%p231) target = $region32
        $region31: #{tpu_custom_call.1} parent=11 // pred_region
          _
        $region32: #{tpu_custom_call.1} parent=11 // pred_fallthru
          _
        // Predicated region
        $region33: #{tpu_custom_call.1} parent=11 // pred_check
          %p234 = pneg %p156
        $region34: #{tpu_custom_call.1} parent=11 // pred_check_branch
          %236 = sbr.rel (%p234) target = $region36
        $region35: #{tpu_custom_call.1} parent=11 // pred_region
          _
        $region36: #{tpu_custom_call.1} parent=11 // pred_fallthru
          _
      $region12: #{tpu_custom_call.1} parent=5 // pred_fallthru
        _
      %p237 = scmp.lt.s32.totalorder %s18, 6
      // Predicated region
      $region37: #{tpu_custom_call.1} parent=5 // pred_check
        %p238 = pneg %p237
      $region38: #{tpu_custom_call.1} parent=5 // pred_check_branch
        %240 = sbr.rel (%p238) target = $region40
      $region39: #{tpu_custom_call.1} parent=5 // pred_region
        _
      $region40: #{tpu_custom_call.1} parent=5 // pred_fallthru
        _
      %p241 = scmp.le.s32.totalorder 1, %s18
      %p242 = scmp.lt.s32.totalorder %s18, 7
      %p243 = pnand %p241, %p242
      %p244 = pneg %p243
      // Predicated region
      $region41: #{tpu_custom_call.1} parent=5 // pred_check
        _
      $region42: #{tpu_custom_call.1} parent=5 // pred_check_branch
        %246 = sbr.rel (%p243) target = $region44
      $region43: #{tpu_custom_call.1} parent=5 // pred_region
        %s247 = ssub.s32 %s18, 1
        // Predicated region
        $region45: #{tpu_custom_call.1} parent=43 // pred_check
          %p248 = pneg %p51
        $region46: #{tpu_custom_call.1} parent=43 // pred_check_branch
          %250 = sbr.rel (%p248) target = $region48
        $region47: #{tpu_custom_call.1} parent=43 // pred_region
          %251 = dma.done [#allocation6], 2048
        $region48: #{tpu_custom_call.1} parent=43 // pred_fallthru
          _
        // Predicated region
        $region49: #{tpu_custom_call.1} parent=43 // pred_check
          %p252 = pneg %p114
        $region50: #{tpu_custom_call.1} parent=43 // pred_check_branch
          %254 = sbr.rel (%p252) target = $region52
        $region51: #{tpu_custom_call.1} parent=43 // pred_region
          %255 = dma.done [#allocation9], 18432
        $region52: #{tpu_custom_call.1} parent=43 // pred_fallthru
          _
        %p256 = pneg %p51
        %p257 = pneg %p48
        %p258 = pneg %p72
        %p259 = pneg %p69
        %p260 = pneg %p93
        %p261 = pneg %p90
        %p262 = pneg %p114
        %p263 = pneg %p111
        %p264 = pneg %p135
        %p265 = pneg %p132
        %p266 = pneg %p156
        %p267 = pneg %p153
        %p268 = pneg %p184
        %p269 = pneg %p181
        %s270 = sand.u32 %s171, 1
        %s271 = scalar_lea.sflag [#allocation7], %s270
        %s272 = sand.u32 %s171, 1
        %s273 = smul.addr %s272, 80
        %s274 = scalar_lea.vmem [#allocation10], %s273
        %s275 = smul.u32 5, %s28
        %p276 = scmp.lt.s32.totalorder %s28, 0
        %s277 = ssub.s32 0, %s28
        %s278 = scalar_select %p276, %s277, %s28
        %s279 = sand.u32 %s278, 1
        %s280 = ssub.s32 0, %s279
        %s281 = scalar_select %p276, %s280, %s279
        %p282 = scmp.ne.s32.totalorder %s281, 0
        %p283 = scmp.lt.s32.totalorder %s281, 0
        %p284 = pnand %p283, %p282
        %p285 = pneg %p284
        %s286 = sadd.s32 %s281, 2
        %s287 = scalar_select %p285, %s286, %s281
        %p288 = scmp.eq.s32.totalorder %s28, 0
        // Predicated region
        $region53: #{tpu_custom_call.1} parent=43 // pred_check
          %p289 = pneg %p288
        $region54: #{tpu_custom_call.1} parent=43 // pred_check_branch
          %291 = sbr.rel (%p289) target = $region56
        $region55: #{tpu_custom_call.1} parent=43 // pred_region
          %s292 = smul.u32 %s27, 272
          %s293 = smul.addr %s292, 16
          %s294 = scalar_lea.hbm %s0, %s293
          // Predicated region
          $region57: #{tpu_custom_call.1} parent=55 // pred_check
            _
          $region58: #{tpu_custom_call.1} parent=55 // pred_check_branch
            %296 = sbr.rel target = $region60
          $region59: #{tpu_custom_call.1} parent=55 // pred_region
            %297 = sst [smem:[#allocation13]] [#allocation12]
            %298 = sst [smem:[#allocation14]] [#allocation11]
          $region60: #{tpu_custom_call.1} parent=55 // pred_fallthru
            _
          %300 = shalt.err (0)
          %s302 = sshll.u32 [#allocation2], 4
          %s303 = int_to_ptr.vmem [resolvable:$true] %s302
          %305 = dma.hbm_to_vmem [thread:$0]  %s294, 1792, %s303, [#allocation4]
        $region56: #{tpu_custom_call.1} parent=43 // pred_fallthru
          _
        %s306 = sadd.s32 %s28, 1
        %p307 = scmp.lt.s32.totalorder %s306, 3
        // Predicated region
        $region61: #{tpu_custom_call.1} parent=43 // pred_check
          %p308 = pneg %p307
        $region62: #{tpu_custom_call.1} parent=43 // pred_check_branch
          %310 = sbr.rel (%p308) target = $region64
        $region63: #{tpu_custom_call.1} parent=43 // pred_region
          %s311 = ssub.s32 1, %s287
          %s312 = smul.u32 %s306, 80
          %s313 = smul.u32 %s27, 272
          %s314 = sadd.s32 %s312, %s313
          %s315 = smul.addr %s314, 16
          %s316 = scalar_lea.hbm %s0, %s315
          %s317 = smul.u32 %s311, 112
          %s318 = scalar_lea.vmem [#allocation2], %s317
          %s319 = scalar_lea.sflag [#allocation4], %s311
          // Predicated region
          $region65: #{tpu_custom_call.1} parent=63 // pred_check
            _
          $region66: #{tpu_custom_call.1} parent=63 // pred_check_branch
            %321 = sbr.rel target = $region68
          $region67: #{tpu_custom_call.1} parent=63 // pred_region
            %322 = sst [smem:[#allocation13]] [#allocation16]
            %323 = sst [smem:[#allocation14]] [#allocation15]
          $region68: #{tpu_custom_call.1} parent=63 // pred_fallthru
            _
          %325 = shalt.err (0)
          %s327 = sshll.u32 %s318, 4
          %s328 = int_to_ptr.vmem [resolvable:$true] %s327
          %330 = dma.hbm_to_vmem [thread:$0]  %s316, 1792, %s328, %s319
        $region64: #{tpu_custom_call.1} parent=43 // pred_fallthru
          _
        %s331 = smul.u32 %s287, 112
        %s332 = scalar_lea.vmem [#allocation2], %s331
        %s333 = scalar_lea.sflag [#allocation4], %s287
        %s334 = smul.u32 112, 1
        %s335 = sshll.u32 %s334, 4
        %336 = dma.done %s333, %s335
        %v337 = vld [vmem:[%s332] sm:$0xff]
        %v338 = vld [vmem:[%s332 + $0x8] sm:$0xff]
        %v339 = vld [vmem:[%s332 + $0x10] sm:$0xff]
        %v340 = vld [vmem:[%s332 + $0x18] sm:$0xff]
        %v341 = vld [vmem:[%s332 + $0x20] sm:$0xff]
        %v342 = vld [vmem:[%s332 + $0x28] sm:$0xff]
        %v343 = vld [vmem:[%s332 + $0x30] sm:$0xff]
        %v344 = vld [vmem:[%s332 + $0x38] sm:$0xff]
        %v345 = vld [vmem:[%s332 + $0x40] sm:$0xff]
        %v346 = vld [vmem:[%s332 + $0x48] sm:$0xff]
        %v347 = vld [vmem:[%s332 + $0x50] sm:$0xff]
        %v348 = vld [vmem:[%s332 + $0x58] sm:$0xff]
        %v349 = vld [vmem:[%s332 + $0x60] sm:$0xff]
        %v350 = vld [vmem:[%s332 + $0x68] sm:$0xff]
        %v351 = vld [vmem:[#allocation5] sm:$0xff]
        %v352 = vld [vmem:[#allocation5 + $0x8] sm:$0xff]
        %v353 = vld [vmem:[#allocation5 + $0x10] sm:$0xff]
        %v354 = vld [vmem:[#allocation5 + $0x18] sm:$0xff]
        %v355 = vld [vmem:[#allocation5 + $0x20] sm:$0xff]
        %v356 = vld [vmem:[#allocation5 + $0x28] sm:$0xff]
        %v357 = vld [vmem:[#allocation5 + $0x30] sm:$0xff]
        %v358 = vld [vmem:[#allocation5 + $0x38] sm:$0xff]
        %v359 = vld [vmem:[#allocation5 + $0x40] sm:$0xff]
        %v360 = vld [vmem:[#allocation5 + $0x48] sm:$0xff]
        %v361 = vld [vmem:[#allocation5 + $0x50] sm:$0xff]
        %v362 = vld [vmem:[#allocation5 + $0x58] sm:$0xff]
        %v363 = vld [vmem:[#allocation5 + $0x60] sm:$0xff]
        %v364 = vld [vmem:[#allocation5 + $0x68] sm:$0xff]
        %v365 = vld [vmem:[#allocation5 + $0x70] sm:$0xff]
        %v366 = vld [vmem:[#allocation5 + $0x78] sm:$0xff]
        %367 = vmatprep.subr.mxu0 0.0
        %368 = vmatpush1.msra.mxu0 %v366
        %369 = vmatprep.subr.mxu0 0.0
        %370 = vmatpush1.msra.mxu0 %v365
        %371 = vmatprep.subr.mxu0 0.0
        %372 = vmatpush1.msra.mxu0 %v364
        %373 = vmatprep.subr.mxu0 0.0
        %374 = vmatpush1.msra.mxu0 %v363
        %375 = vmatprep.subr.mxu0 0.0
        %376 = vmatpush1.msra.mxu0 %v362
        %377 = vmatprep.subr.mxu0 0.0
        %378 = vmatpush1.msra.mxu0 %v361
        %379 = vmatprep.subr.mxu0 0.0
        %380 = vmatpush1.msra.mxu0 %v360
        %381 = vmatprep.subr.mxu0 0.0
        %382 = vmatpush1.msra.mxu0 %v359
        %383 = vmatprep.subr.mxu0 0.0
        %384 = vmatpush1.msra.mxu0 %v358
        %385 = vmatprep.subr.mxu0 0.0
        %386 = vmatpush1.msra.mxu0 %v357
        %387 = vmatprep.subr.mxu0 0.0
        %388 = vmatpush1.msra.mxu0 %v356
        %389 = vmatprep.subr.mxu0 0.0
        %390 = vmatpush1.msra.mxu0 %v355
        %391 = vmatprep.subr.mxu0 0.0
        %392 = vmatpush1.msra.mxu0 %v354
        %393 = vmatprep.subr.mxu0 0.0
        %394 = vmatpush1.msra.mxu0 %v353
        %395 = vmatprep.subr.mxu0 0.0
        %396 = vmatpush1.msra.mxu0 %v352
        %397 = vmatprep.subr.mxu0 0.0
        %398 = vmatpush1.msra.mxu0 %v351
        %399 = vmatprep.subr.mxu0 0.0
        %400 = vmatpush2.msra.mxu0 0.0
        %401 = vmatprep.subr.mxu0 0.0
        %402 = vmatpush2.msra.mxu0 0.0
        %403 = vmatprep.subr.mxu0 0.0
        %404 = vmatpush2.msra.mxu0 0.0
        %405 = vmatprep.subr.mxu0 0.0
        %406 = vmatpush2.msra.mxu0 0.0
        %407 = vmatprep.subr.mxu0 0.0
        %408 = vmatpush2.msra.mxu0 0.0
        %409 = vmatprep.subr.mxu0 0.0
        %410 = vmatpush2.msra.mxu0 0.0
        %411 = vmatprep.subr.mxu0 0.0
        %412 = vmatpush2.msra.mxu0 0.0
        %413 = vmatprep.subr.mxu0 0.0
        %414 = vmatpush2.msra.mxu0 0.0
        %415 = vmatprep.subr.mxu0 0.0
        %416 = vmatpush2.msra.mxu0 0.0
        %417 = vmatprep.subr.mxu0 0.0
        %418 = vmatpush2.msra.mxu0 0.0
        %419 = vmatprep.subr.mxu0 0.0
        %420 = vmatpush2.msra.mxu0 0.0
        %421 = vmatprep.subr.mxu0 0.0
        %422 = vmatpush2.msra.mxu0 0.0
        %423 = vmatprep.subr.mxu0 0.0
        %424 = vmatpush2.msra.mxu0 0.0
        %425 = vmatprep.subr.mxu0 0.0
        %426 = vmatpush2.msra.mxu0 0.0
        %427 = vmatprep.subr.mxu0 0.0
        %428 = vmatpush2.msra.mxu0 0.0
        %429 = vmatprep.subr.mxu0 0.0
        %430 = vmatpush2.msra.mxu0 0.0
        %431 = vmatprep.mubr.f32.mxu0 0.0
        %432 = vmatmul.mubr.f32.gmra.mxu0 %v337
        %v433 = vpop.f32.mrf.mxu0
        %v434 = vadd.f32 0.0, %v433
        %v435 = vpop.f32.mrf.mxu0
        %436 = vmatprep.mubr.f32.mxu0 0.0
        %437 = vmatmul.mubr.f32.gmra.mxu0 %v338
        %v438 = vpop.f32.mrf.mxu0
        %v439 = vadd.f32 0.0, %v438
        %v440 = vpop.f32.mrf.mxu0
        %441 = vmatprep.mubr.f32.mxu0 0.0
        %442 = vmatmul.mubr.f32.gmra.mxu0 %v339
        %v443 = vpop.f32.mrf.mxu0
        %v444 = vadd.f32 0.0, %v443
        %v445 = vpop.f32.mrf.mxu0
        %446 = vmatprep.mubr.f32.mxu0 0.0
        %447 = vmatmul.mubr.f32.gmra.mxu0 %v340
        %v448 = vpop.f32.mrf.mxu0
        %v449 = vadd.f32 0.0, %v448
        %v450 = vpop.f32.mrf.mxu0
        %451 = vmatprep.mubr.f32.mxu0 0.0
        %452 = vmatmul.mubr.f32.gmra.mxu0 %v341
        %v453 = vpop.f32.mrf.mxu0
        %v454 = vadd.f32 0.0, %v453
        %v455 = vpop.f32.mrf.mxu0
        %456 = vmatprep.mubr.f32.mxu0 0.0
        %457 = vmatmul.mubr.f32.gmra.mxu0 %v342
        %v458 = vpop.f32.mrf.mxu0
        %v459 = vadd.f32 0.0, %v458
        %v460 = vpop.f32.mrf.mxu0
        %461 = vmatprep.mubr.f32.mxu0 0.0
        %462 = vmatmul.mubr.f32.gmra.mxu0 %v343
        %v463 = vpop.f32.mrf.mxu0
        %v464 = vadd.f32 0.0, %v463
        %v465 = vpop.f32.mrf.mxu0
        %466 = vmatprep.mubr.f32.mxu0 0.0
        %467 = vmatmul.mubr.f32.gmra.mxu0 %v344
        %v468 = vpop.f32.mrf.mxu0
        %v469 = vadd.f32 0.0, %v468
        %v470 = vpop.f32.mrf.mxu0
        %471 = vmatprep.mubr.f32.mxu0 0.0
        %472 = vmatmul.mubr.f32.gmra.mxu0 %v345
        %v473 = vpop.f32.mrf.mxu0
        %v474 = vadd.f32 0.0, %v473
        %v475 = vpop.f32.mrf.mxu0
        %476 = vmatprep.mubr.f32.mxu0 0.0
        %477 = vmatmul.mubr.f32.gmra.mxu0 %v346
        %v478 = vpop.f32.mrf.mxu0
        %v479 = vadd.f32 0.0, %v478
        %v480 = vpop.f32.mrf.mxu0
        %481 = vmatprep.mubr.f32.mxu0 0.0
        %482 = vmatmul.mubr.f32.gmra.mxu0 %v347
        %v483 = vpop.f32.mrf.mxu0
        %v484 = vadd.f32 0.0, %v483
        %v485 = vpop.f32.mrf.mxu0
        %486 = vmatprep.mubr.f32.mxu0 0.0
        %487 = vmatmul.mubr.f32.gmra.mxu0 %v348
        %v488 = vpop.f32.mrf.mxu0
        %v489 = vadd.f32 0.0, %v488
        %v490 = vpop.f32.mrf.mxu0
        %491 = vmatprep.mubr.f32.mxu0 0.0
        %492 = vmatmul.mubr.f32.gmra.mxu0 %v349
        %v493 = vpop.f32.mrf.mxu0
        %v494 = vadd.f32 0.0, %v493
        %v495 = vpop.f32.mrf.mxu0
        %496 = vmatprep.mubr.f32.mxu0 0.0
        %497 = vmatmul.mubr.f32.gmra.mxu0 %v350
        %v498 = vpop.f32.mrf.mxu0
        %v499 = vadd.f32 0.0, %v498
        %v500 = vpop.f32.mrf.mxu0
        %501 = vdwg.mxu0
        %v502 = vld [vmem:[%s2] sm:$0x1]
        %v504 = vlaneseq
        %v505 = vshrl.u32 %v504, 7
        %v506 = vsub.s32 0, %v505
        %v507 = vrot.slane %v502, %v506
        %v509 = vmul.f32 %v434, %v507
        %v510 = vmul.f32 %v439, %v507
        %v511 = vmul.f32 %v444, %v507
        %v512 = vmul.f32 %v449, %v507
        %v513 = vmul.f32 %v454, %v507
        %v514 = vmul.f32 %v459, %v507
        %v515 = vmul.f32 %v464, %v507
        %v516 = vmul.f32 %v469, %v507
        %v517 = vmul.f32 %v474, %v507
        %v518 = vmul.f32 %v479, %v507
        %v519 = vmul.f32 %v484, %v507
        %v520 = vmul.f32 %v489, %v507
        %v521 = vmul.f32 %v494, %v507
        %v522 = vmul.f32 %v499, %v507
        %v523 = vld [vmem:[%s3] sm:$0x1]
        %v525 = vlaneseq
        %v526 = vshrl.u32 %v525, 7
        %v527 = vsub.s32 0, %v526
        %v528 = vrot.slane %v523, %v527
        %v530 = vadd.f32 %v509, %v528
        %v531 = vadd.f32 %v510, %v528
        %v532 = vadd.f32 %v511, %v528
        %v533 = vadd.f32 %v512, %v528
        %v534 = vadd.f32 %v513, %v528
        %v535 = vadd.f32 %v514, %v528
        %v536 = vadd.f32 %v515, %v528
        %v537 = vadd.f32 %v516, %v528
        %v538 = vadd.f32 %v517, %v528
        %v539 = vadd.f32 %v518, %v528
        %v540 = vadd.f32 %v519, %v528
        %v541 = vadd.f32 %v520, %v528
        %v542 = vadd.f32 %v521, %v528
        %v543 = vadd.f32 %v522, %v528
        %v544 = vmax.f32 %v530, 0.0
        %v545 = vmax.f32 %v531, 0.0
        %v546 = vmax.f32 %v532, 0.0
        %v547 = vmax.f32 %v533, 0.0
        %v548 = vmax.f32 %v534, 0.0
        %v549 = vmax.f32 %v535, 0.0
        %v550 = vmax.f32 %v536, 0.0
        %v551 = vmax.f32 %v537, 0.0
        %v552 = vmax.f32 %v538, 0.0
        %v553 = vmax.f32 %v539, 0.0
        %v554 = vmax.f32 %v540, 0.0
        %v555 = vmax.f32 %v541, 0.0
        %v556 = vmax.f32 %v542, 0.0
        %v557 = vmax.f32 %v543, 0.0
        %558 = vst [vmem:[#allocation3] sm:$0xff] %v544
        %559 = vst [vmem:[#allocation3 + $0x8] sm:$0xff] %v545
        %560 = vst [vmem:[#allocation3 + $0x10] sm:$0xff] %v546
        %561 = vst [vmem:[#allocation3 + $0x18] sm:$0xff] %v547
        %562 = vst [vmem:[#allocation3 + $0x20] sm:$0xff] %v548
        %563 = vst [vmem:[#allocation3 + $0x28] sm:$0xff] %v549
        %564 = vst [vmem:[#allocation3 + $0x30] sm:$0xff] %v550
        %565 = vst [vmem:[#allocation3 + $0x38] sm:$0xff] %v551
        %566 = vst [vmem:[#allocation3 + $0x40] sm:$0xff] %v552
        %567 = vst [vmem:[#allocation3 + $0x48] sm:$0xff] %v553
        %568 = vst [vmem:[#allocation3 + $0x50] sm:$0xff] %v554
        %569 = vst [vmem:[#allocation3 + $0x58] sm:$0xff] %v555
        %570 = vst [vmem:[#allocation3 + $0x60] sm:$0xff] %v556
        %571 = vst [vmem:[#allocation3 + $0x68] sm:$0xff] %v557
        %572 = vst [vmem:[#allocation3 + $0x70] sm:$0xff] 0.0
        %v573 = vld [vmem:[#allocation3] sm:$0xff]
        %v574 = vld [vmem:[#allocation3 + $0x8] sm:$0xff]
        %v575 = vld [vmem:[#allocation3 + $0x10] sm:$0xff]
        %v576 = vld [vmem:[#allocation3 + $0x18] sm:$0xff]
        %v577 = vld [vmem:[#allocation3 + $0x20] sm:$0xff]
        %v578 = vld [vmem:[#allocation3 + $0x28] sm:$0xff]
        %v579 = vld [vmem:[#allocation3 + $0x30] sm:$0xff]
        %v580 = vld [vmem:[#allocation3 + $0x38] sm:$0xff]
        %v581 = vld [vmem:[#allocation3 + $0x40] sm:$0xff]
        %v582 = vld [vmem:[#allocation3 + $0x48] sm:$0xff]
        %v583 = vld [vmem:[#allocation8] sm:$0xff]
        %v584 = vld [vmem:[#allocation8 + $0x8] sm:$0xff]
        %v585 = vld [vmem:[#allocation8 + $0x10] sm:$0xff]
        %v586 = vld [vmem:[#allocation8 + $0x18] sm:$0xff]
        %v587 = vld [vmem:[#allocation8 + $0x20] sm:$0xff]
        %v588 = vld [vmem:[#allocation8 + $0x28] sm:$0xff]
        %v589 = vld [vmem:[#allocation8 + $0x30] sm:$0xff]
        %v590 = vld [vmem:[#allocation8 + $0x38] sm:$0xff]
        %v591 = vld [vmem:[#allocation8 + $0x40] sm:$0xff]
        %v592 = vld [vmem:[#allocation8 + $0x48] sm:$0xff]
        %v593 = vld [vmem:[#allocation8 + $0x50] sm:$0xff]
        %v594 = vld [vmem:[#allocation8 + $0x58] sm:$0xff]
        %v595 = vld [vmem:[#allocation8 + $0x60] sm:$0xff]
        %v596 = vld [vmem:[#allocation8 + $0x68] sm:$0xff]
        %v597 = vld [vmem:[#allocation8 + $0x70] sm:$0xff]
        %v598 = vld [vmem:[#allocation8 + $0x78] sm:$0xff]
        %v599 = vld [vmem:[#allocation3 + $0x1] sm:$0xff]
        %v600 = vld [vmem:[#allocation3 + $0x9] sm:$0xff]
        %v601 = vld [vmem:[#allocation3 + $0x11] sm:$0xff]
        %v602 = vld [vmem:[#allocation3 + $0x19] sm:$0xff]
        %v603 = vld [vmem:[#allocation3 + $0x21] sm:$0xff]
        %v604 = vld [vmem:[#allocation3 + $0x29] sm:$0xff]
        %v605 = vld [vmem:[#allocation3 + $0x31] sm:$0xff]
        %v606 = vld [vmem:[#allocation3 + $0x39] sm:$0xff]
        %v607 = vld [vmem:[#allocation3 + $0x41] sm:$0xff]
        %v608 = vld [vmem:[#allocation3 + $0x49] sm:$0xff]
        %s609 = scalar_lea.vmem [#allocation8], 128
        %v610 = vld [vmem:[%s609] sm:$0xff]
        %v611 = vld [vmem:[%s609 + $0x8] sm:$0xff]
        %v612 = vld [vmem:[%s609 + $0x10] sm:$0xff]
        %v613 = vld [vmem:[%s609 + $0x18] sm:$0xff]
        %v614 = vld [vmem:[%s609 + $0x20] sm:$0xff]
        %v615 = vld [vmem:[%s609 + $0x28] sm:$0xff]
        %v616 = vld [vmem:[%s609 + $0x30] sm:$0xff]
        %v617 = vld [vmem:[%s609 + $0x38] sm:$0xff]
        %v618 = vld [vmem:[%s609 + $0x40] sm:$0xff]
        %v619 = vld [vmem:[%s609 + $0x48] sm:$0xff]
        %v620 = vld [vmem:[%s609 + $0x50] sm:$0xff]
        %v621 = vld [vmem:[%s609 + $0x58] sm:$0xff]
        %v622 = vld [vmem:[%s609 + $0x60] sm:$0xff]
        %v623 = vld [vmem:[%s609 + $0x68] sm:$0xff]
        %v624 = vld [vmem:[%s609 + $0x70] sm:$0xff]
        %v625 = vld [vmem:[%s609 + $0x78] sm:$0xff]
        %626 = vmatprep.subr.mxu0 0.0
        %627 = vmatpush1.msra.mxu0 %v625
        %628 = vmatprep.subr.mxu0 0.0
        %629 = vmatpush1.msra.mxu0 %v624
        %630 = vmatprep.subr.mxu0 0.0
        %631 = vmatpush1.msra.mxu0 %v623
        %632 = vmatprep.subr.mxu0 0.0
        %633 = vmatpush1.msra.mxu0 %v622
        %634 = vmatprep.subr.mxu0 0.0
        %635 = vmatpush1.msra.mxu0 %v621
        %636 = vmatprep.subr.mxu0 0.0
        %637 = vmatpush1.msra.mxu0 %v620
        %638 = vmatprep.subr.mxu0 0.0
        %639 = vmatpush1.msra.mxu0 %v619
        %640 = vmatprep.subr.mxu0 0.0
        %641 = vmatpush1.msra.mxu0 %v618
        %642 = vmatprep.subr.mxu0 0.0
        %643 = vmatpush1.msra.mxu0 %v617
        %644 = vmatprep.subr.mxu0 0.0
        %645 = vmatpush1.msra.mxu0 %v616
        %646 = vmatprep.subr.mxu0 0.0
        %647 = vmatpush1.msra.mxu0 %v615
        %648 = vmatprep.subr.mxu0 0.0
        %649 = vmatpush1.msra.mxu0 %v614
        %650 = vmatprep.subr.mxu0 0.0
        %651 = vmatpush1.msra.mxu0 %v613
        %652 = vmatprep.subr.mxu0 0.0
        %653 = vmatpush1.msra.mxu0 %v612
        %654 = vmatprep.subr.mxu0 0.0
        %655 = vmatpush1.msra.mxu0 %v611
        %656 = vmatprep.subr.mxu0 0.0
        %657 = vmatpush1.msra.mxu0 %v610
        %658 = vmatprep.subr.mxu0 0.0
        %659 = vmatpush2.msra.mxu0 0.0
        %660 = vmatprep.subr.mxu0 0.0
        %661 = vmatpush2.msra.mxu0 0.0
        %662 = vmatprep.subr.mxu0 0.0
        %663 = vmatpush2.msra.mxu0 0.0
        %664 = vmatprep.subr.mxu0 0.0
        %665 = vmatpush2.msra.mxu0 0.0
        %666 = vmatprep.subr.mxu0 0.0
        %667 = vmatpush2.msra.mxu0 0.0
        %668 = vmatprep.subr.mxu0 0.0
        %669 = vmatpush2.msra.mxu0 0.0
        %670 = vmatprep.subr.mxu0 0.0
        %671 = vmatpush2.msra.mxu0 0.0
        %672 = vmatprep.subr.mxu0 0.0
        %673 = vmatpush2.msra.mxu0 0.0
        %674 = vmatprep.subr.mxu0 0.0
        %675 = vmatpush2.msra.mxu0 0.0
        %676 = vmatprep.subr.mxu0 0.0
        %677 = vmatpush2.msra.mxu0 0.0
        %678 = vmatprep.subr.mxu0 0.0
        %679 = vmatpush2.msra.mxu0 0.0
        %680 = vmatprep.subr.mxu0 0.0
        %681 = vmatpush2.msra.mxu0 0.0
        %682 = vmatprep.subr.mxu0 0.0
        %683 = vmatpush2.msra.mxu0 0.0
        %684 = vmatprep.subr.mxu0 0.0
        %685 = vmatpush2.msra.mxu0 0.0
        %686 = vmatprep.subr.mxu0 0.0
        %687 = vmatpush2.msra.mxu0 0.0
        %688 = vmatprep.subr.mxu0 0.0
        %689 = vmatpush2.msra.mxu0 0.0
        %690 = vmatprep.mubr.f32.mxu0 0.0
        %691 = vmatmul.mubr.f32.gmra.mxu0 %v599
        %v692 = vpop.f32.mrf.mxu0
        %v693 = vadd.f32 0.0, %v692
        %v694 = vpop.f32.mrf.mxu0
        %695 = vmatprep.mubr.f32.mxu0 0.0
        %696 = vmatmul.mubr.f32.gmra.mxu0 %v600
        %v697 = vpop.f32.mrf.mxu0
        %v698 = vadd.f32 0.0, %v697
        %v699 = vpop.f32.mrf.mxu0
        %700 = vmatprep.mubr.f32.mxu0 0.0
        %701 = vmatmul.mubr.f32.gmra.mxu0 %v601
        %v702 = vpop.f32.mrf.mxu0
        %v703 = vadd.f32 0.0, %v702
        %v704 = vpop.f32.mrf.mxu0
        %705 = vmatprep.mubr.f32.mxu0 0.0
        %706 = vmatmul.mubr.f32.gmra.mxu0 %v602
        %v707 = vpop.f32.mrf.mxu0
        %v708 = vadd.f32 0.0, %v707
        %v709 = vpop.f32.mrf.mxu0
        %710 = vmatprep.mubr.f32.mxu0 0.0
        %711 = vmatmul.mubr.f32.gmra.mxu0 %v603
        %v712 = vpop.f32.mrf.mxu0
        %v713 = vadd.f32 0.0, %v712
        %v714 = vpop.f32.mrf.mxu0
        %715 = vmatprep.mubr.f32.mxu0 0.0
        %716 = vmatmul.mubr.f32.gmra.mxu0 %v604
        %v717 = vpop.f32.mrf.mxu0
        %v718 = vadd.f32 0.0, %v717
        %v719 = vpop.f32.mrf.mxu0
        %720 = vmatprep.mubr.f32.mxu0 0.0
        %721 = vmatmul.mubr.f32.gmra.mxu0 %v605
        %v722 = vpop.f32.mrf.mxu0
        %v723 = vadd.f32 0.0, %v722
        %v724 = vpop.f32.mrf.mxu0
        %725 = vmatprep.mubr.f32.mxu0 0.0
        %726 = vmatmul.mubr.f32.gmra.mxu0 %v606
        %v727 = vpop.f32.mrf.mxu0
        %v728 = vadd.f32 0.0, %v727
        %v729 = vpop.f32.mrf.mxu0
        %730 = vmatprep.mubr.f32.mxu0 0.0
        %731 = vmatmul.mubr.f32.gmra.mxu0 %v607
        %v732 = vpop.f32.mrf.mxu0
        %v733 = vadd.f32 0.0, %v732
        %v734 = vpop.f32.mrf.mxu0
        %735 = vmatprep.mubr.f32.mxu0 0.0
        %736 = vmatmul.mubr.f32.gmra.mxu0 %v608
        %v737 = vpop.f32.mrf.mxu0
        %v738 = vadd.f32 0.0, %v737
        %v739 = vpop.f32.mrf.mxu0
        %740 = vdwg.mxu0
        %741 = vmatprep.subr.mxu0 0.0
        %742 = vmatpush1.msra.mxu0 %v598
        %743 = vmatprep.subr.mxu0 0.0
        %744 = vmatpush1.msra.mxu0 %v597
        %745 = vmatprep.subr.mxu0 0.0
        %746 = vmatpush1.msra.mxu0 %v596
        %747 = vmatprep.subr.mxu0 0.0
        %748 = vmatpush1.msra.mxu0 %v595
        %749 = vmatprep.subr.mxu0 0.0
        %750 = vmatpush1.msra.mxu0 %v594
        %751 = vmatprep.subr.mxu0 0.0
        %752 = vmatpush1.msra.mxu0 %v593
        %753 = vmatprep.subr.mxu0 0.0
        %754 = vmatpush1.msra.mxu0 %v592
        %755 = vmatprep.subr.mxu0 0.0
        %756 = vmatpush1.msra.mxu0 %v591
        %757 = vmatprep.subr.mxu0 0.0
        %758 = vmatpush1.msra.mxu0 %v590
        %759 = vmatprep.subr.mxu0 0.0
        %760 = vmatpush1.msra.mxu0 %v589
        %761 = vmatprep.subr.mxu0 0.0
        %762 = vmatpush1.msra.mxu0 %v588
        %763 = vmatprep.subr.mxu0 0.0
        %764 = vmatpush1.msra.mxu0 %v587
        %765 = vmatprep.subr.mxu0 0.0
        %766 = vmatpush1.msra.mxu0 %v586
        %767 = vmatprep.subr.mxu0 0.0
        %768 = vmatpush1.msra.mxu0 %v585
        %769 = vmatprep.subr.mxu0 0.0
        %770 = vmatpush1.msra.mxu0 %v584
        %771 = vmatprep.subr.mxu0 0.0
        %772 = vmatpush1.msra.mxu0 %v583
        %773 = vmatprep.subr.mxu0 0.0
        %774 = vmatpush2.msra.mxu0 0.0
        %775 = vmatprep.subr.mxu0 0.0
        %776 = vmatpush2.msra.mxu0 0.0
        %777 = vmatprep.subr.mxu0 0.0
        %778 = vmatpush2.msra.mxu0 0.0
        %779 = vmatprep.subr.mxu0 0.0
        %780 = vmatpush2.msra.mxu0 0.0
        %781 = vmatprep.subr.mxu0 0.0
        %782 = vmatpush2.msra.mxu0 0.0
        %783 = vmatprep.subr.mxu0 0.0
        %784 = vmatpush2.msra.mxu0 0.0
        %785 = vmatprep.subr.mxu0 0.0
        %786 = vmatpush2.msra.mxu0 0.0
        %787 = vmatprep.subr.mxu0 0.0
        %788 = vmatpush2.msra.mxu0 0.0
        %789 = vmatprep.subr.mxu0 0.0
        %790 = vmatpush2.msra.mxu0 0.0
        %791 = vmatprep.subr.mxu0 0.0
        %792 = vmatpush2.msra.mxu0 0.0
        %793 = vmatprep.subr.mxu0 0.0
        %794 = vmatpush2.msra.mxu0 0.0
        %795 = vmatprep.subr.mxu0 0.0
        %796 = vmatpush2.msra.mxu0 0.0
        %797 = vmatprep.subr.mxu0 0.0
        %798 = vmatpush2.msra.mxu0 0.0
        %799 = vmatprep.subr.mxu0 0.0
        %800 = vmatpush2.msra.mxu0 0.0
        %801 = vmatprep.subr.mxu0 0.0
        %802 = vmatpush2.msra.mxu0 0.0
        %803 = vmatprep.subr.mxu0 0.0
        %804 = vmatpush2.msra.mxu0 0.0
        %805 = vmatprep.mubr.f32.mxu0 0.0
        %806 = vmatmul.mubr.f32.gmra.mxu0 %v573
        %v807 = vpop.f32.mrf.mxu0
        %v808 = vadd.f32 %v693, %v807
        %v809 = vpop.f32.mrf.mxu0
        %810 = vmatprep.mubr.f32.mxu0 0.0
        %811 = vmatmul.mubr.f32.gmra.mxu0 %v574
        %v812 = vpop.f32.mrf.mxu0
        %v813 = vadd.f32 %v698, %v812
        %v814 = vpop.f32.mrf.mxu0
        %815 = vmatprep.mubr.f32.mxu0 0.0
        %816 = vmatmul.mubr.f32.gmra.mxu0 %v575
        %v817 = vpop.f32.mrf.mxu0
        %v818 = vadd.f32 %v703, %v817
        %v819 = vpop.f32.mrf.mxu0
        %820 = vmatprep.mubr.f32.mxu0 0.0
        %821 = vmatmul.mubr.f32.gmra.mxu0 %v576
        %v822 = vpop.f32.mrf.mxu0
        %v823 = vadd.f32 %v708, %v822
        %v824 = vpop.f32.mrf.mxu0
        %825 = vmatprep.mubr.f32.mxu0 0.0
        %826 = vmatmul.mubr.f32.gmra.mxu0 %v577
        %v827 = vpop.f32.mrf.mxu0
        %v828 = vadd.f32 %v713, %v827
        %v829 = vpop.f32.mrf.mxu0
        %830 = vmatprep.mubr.f32.mxu0 0.0
        %831 = vmatmul.mubr.f32.gmra.mxu0 %v578
        %v832 = vpop.f32.mrf.mxu0
        %v833 = vadd.f32 %v718, %v832
        %v834 = vpop.f32.mrf.mxu0
        %835 = vmatprep.mubr.f32.mxu0 0.0
        %836 = vmatmul.mubr.f32.gmra.mxu0 %v579
        %v837 = vpop.f32.mrf.mxu0
        %v838 = vadd.f32 %v723, %v837
        %v839 = vpop.f32.mrf.mxu0
        %840 = vmatprep.mubr.f32.mxu0 0.0
        %841 = vmatmul.mubr.f32.gmra.mxu0 %v580
        %v842 = vpop.f32.mrf.mxu0
        %v843 = vadd.f32 %v728, %v842
        %v844 = vpop.f32.mrf.mxu0
        %845 = vmatprep.mubr.f32.mxu0 0.0
        %846 = vmatmul.mubr.f32.gmra.mxu0 %v581
        %v847 = vpop.f32.mrf.mxu0
        %v848 = vadd.f32 %v733, %v847
        %v849 = vpop.f32.mrf.mxu0
        %850 = vmatprep.mubr.f32.mxu0 0.0
        %851 = vmatmul.mubr.f32.gmra.mxu0 %v582
        %v852 = vpop.f32.mrf.mxu0
        %v853 = vadd.f32 %v738, %v852
        %v854 = vpop.f32.mrf.mxu0
        %855 = vdwg.mxu0
        %v856 = vld [vmem:[#allocation3 + $0x2] sm:$0xff]
        %v857 = vld [vmem:[#allocation3 + $0xa] sm:$0xff]
        %v858 = vld [vmem:[#allocation3 + $0x12] sm:$0xff]
        %v859 = vld [vmem:[#allocation3 + $0x1a] sm:$0xff]
        %v860 = vld [vmem:[#allocation3 + $0x22] sm:$0xff]
        %v861 = vld [vmem:[#allocation3 + $0x2a] sm:$0xff]
        %v862 = vld [vmem:[#allocation3 + $0x32] sm:$0xff]
        %v863 = vld [vmem:[#allocation3 + $0x3a] sm:$0xff]
        %v864 = vld [vmem:[#allocation3 + $0x42] sm:$0xff]
        %v865 = vld [vmem:[#allocation3 + $0x4a] sm:$0xff]
        %s866 = scalar_lea.vmem [#allocation8], 256
        %v867 = vld [vmem:[%s866] sm:$0xff]
        %v868 = vld [vmem:[%s866 + $0x8] sm:$0xff]
        %v869 = vld [vmem:[%s866 + $0x10] sm:$0xff]
        %v870 = vld [vmem:[%s866 + $0x18] sm:$0xff]
        %v871 = vld [vmem:[%s866 + $0x20] sm:$0xff]
        %v872 = vld [vmem:[%s866 + $0x28] sm:$0xff]
        %v873 = vld [vmem:[%s866 + $0x30] sm:$0xff]
        %v874 = vld [vmem:[%s866 + $0x38] sm:$0xff]
        %v875 = vld [vmem:[%s866 + $0x40] sm:$0xff]
        %v876 = vld [vmem:[%s866 + $0x48] sm:$0xff]
        %v877 = vld [vmem:[%s866 + $0x50] sm:$0xff]
        %v878 = vld [vmem:[%s866 + $0x58] sm:$0xff]
        %v879 = vld [vmem:[%s866 + $0x60] sm:$0xff]
        %v880 = vld [vmem:[%s866 + $0x68] sm:$0xff]
        %v881 = vld [vmem:[%s866 + $0x70] sm:$0xff]
        %v882 = vld [vmem:[%s866 + $0x78] sm:$0xff]
        %883 = vmatprep.subr.mxu0 0.0
        %884 = vmatpush1.msra.mxu0 %v882
        %885 = vmatprep.subr.mxu0 0.0
        %886 = vmatpush1.msra.mxu0 %v881
        %887 = vmatprep.subr.mxu0 0.0
        %888 = vmatpush1.msra.mxu0 %v880
        %889 = vmatprep.subr.mxu0 0.0
        %890 = vmatpush1.msra.mxu0 %v879
        %891 = vmatprep.subr.mxu0 0.0
        %892 = vmatpush1.msra.mxu0 %v878
        %893 = vmatprep.subr.mxu0 0.0
        %894 = vmatpush1.msra.mxu0 %v877
        %895 = vmatprep.subr.mxu0 0.0
        %896 = vmatpush1.msra.mxu0 %v876
        %897 = vmatprep.subr.mxu0 0.0
        %898 = vmatpush1.msra.mxu0 %v875
        %899 = vmatprep.subr.mxu0 0.0
        %900 = vmatpush1.msra.mxu0 %v874
        %901 = vmatprep.subr.mxu0 0.0
        %902 = vmatpush1.msra.mxu0 %v873
        %903 = vmatprep.subr.mxu0 0.0
        %904 = vmatpush1.msra.mxu0 %v872
        %905 = vmatprep.subr.mxu0 0.0
        %906 = vmatpush1.msra.mxu0 %v871
        %907 = vmatprep.subr.mxu0 0.0
        %908 = vmatpush1.msra.mxu0 %v870
        %909 = vmatprep.subr.mxu0 0.0
        %910 = vmatpush1.msra.mxu0 %v869
        %911 = vmatprep.subr.mxu0 0.0
        %912 = vmatpush1.msra.mxu0 %v868
        %913 = vmatprep.subr.mxu0 0.0
        %914 = vmatpush1.msra.mxu0 %v867
        %915 = vmatprep.subr.mxu0 0.0
        %916 = vmatpush2.msra.mxu0 0.0
        %917 = vmatprep.subr.mxu0 0.0
        %918 = vmatpush2.msra.mxu0 0.0
        %919 = vmatprep.subr.mxu0 0.0
        %920 = vmatpush2.msra.mxu0 0.0
        %921 = vmatprep.subr.mxu0 0.0
        %922 = vmatpush2.msra.mxu0 0.0
        %923 = vmatprep.subr.mxu0 0.0
        %924 = vmatpush2.msra.mxu0 0.0
        %925 = vmatprep.subr.mxu0 0.0
        %926 = vmatpush2.msra.mxu0 0.0
        %927 = vmatprep.subr.mxu0 0.0
        %928 = vmatpush2.msra.mxu0 0.0
        %929 = vmatprep.subr.mxu0 0.0
        %930 = vmatpush2.msra.mxu0 0.0
        %931 = vmatprep.subr.mxu0 0.0
        %932 = vmatpush2.msra.mxu0 0.0
        %933 = vmatprep.subr.mxu0 0.0
        %934 = vmatpush2.msra.mxu0 0.0
        %935 = vmatprep.subr.mxu0 0.0
        %936 = vmatpush2.msra.mxu0 0.0
        %937 = vmatprep.subr.mxu0 0.0
        %938 = vmatpush2.msra.mxu0 0.0
        %939 = vmatprep.subr.mxu0 0.0
        %940 = vmatpush2.msra.mxu0 0.0
        %941 = vmatprep.subr.mxu0 0.0
        %942 = vmatpush2.msra.mxu0 0.0
        %943 = vmatprep.subr.mxu0 0.0
        %944 = vmatpush2.msra.mxu0 0.0
        %945 = vmatprep.subr.mxu0 0.0
        %946 = vmatpush2.msra.mxu0 0.0
        %947 = vmatprep.mubr.f32.mxu0 0.0
        %948 = vmatmul.mubr.f32.gmra.mxu0 %v856
        %v949 = vpop.f32.mrf.mxu0
        %v950 = vadd.f32 0.0, %v949
        %v951 = vpop.f32.mrf.mxu0
        %952 = vmatprep.mubr.f32.mxu0 0.0
        %953 = vmatmul.mubr.f32.gmra.mxu0 %v857
        %v954 = vpop.f32.mrf.mxu0
        %v955 = vadd.f32 0.0, %v954
        %v956 = vpop.f32.mrf.mxu0
        %957 = vmatprep.mubr.f32.mxu0 0.0
        %958 = vmatmul.mubr.f32.gmra.mxu0 %v858
        %v959 = vpop.f32.mrf.mxu0
        %v960 = vadd.f32 0.0, %v959
        %v961 = vpop.f32.mrf.mxu0
        %962 = vmatprep.mubr.f32.mxu0 0.0
        %963 = vmatmul.mubr.f32.gmra.mxu0 %v859
        %v964 = vpop.f32.mrf.mxu0
        %v965 = vadd.f32 0.0, %v964
        %v966 = vpop.f32.mrf.mxu0
        %967 = vmatprep.mubr.f32.mxu0 0.0
        %968 = vmatmul.mubr.f32.gmra.mxu0 %v860
        %v969 = vpop.f32.mrf.mxu0
        %v970 = vadd.f32 0.0, %v969
        %v971 = vpop.f32.mrf.mxu0
        %972 = vmatprep.mubr.f32.mxu0 0.0
        %973 = vmatmul.mubr.f32.gmra.mxu0 %v861
        %v974 = vpop.f32.mrf.mxu0
        %v975 = vadd.f32 0.0, %v974
        %v976 = vpop.f32.mrf.mxu0
        %977 = vmatprep.mubr.f32.mxu0 0.0
        %978 = vmatmul.mubr.f32.gmra.mxu0 %v862
        %v979 = vpop.f32.mrf.mxu0
        %v980 = vadd.f32 0.0, %v979
        %v981 = vpop.f32.mrf.mxu0
        %982 = vmatprep.mubr.f32.mxu0 0.0
        %983 = vmatmul.mubr.f32.gmra.mxu0 %v863
        %v984 = vpop.f32.mrf.mxu0
        %v985 = vadd.f32 0.0, %v984
        %v986 = vpop.f32.mrf.mxu0
        %987 = vmatprep.mubr.f32.mxu0 0.0
        %988 = vmatmul.mubr.f32.gmra.mxu0 %v864
        %v989 = vpop.f32.mrf.mxu0
        %v990 = vadd.f32 0.0, %v989
        %v991 = vpop.f32.mrf.mxu0
        %992 = vmatprep.mubr.f32.mxu0 0.0
        %993 = vmatmul.mubr.f32.gmra.mxu0 %v865
        %v994 = vpop.f32.mrf.mxu0
        %v995 = vadd.f32 0.0, %v994
        %v996 = vpop.f32.mrf.mxu0
        %997 = vdwg.mxu0
        %v998 = vadd.f32 %v808, %v950
        %v999 = vadd.f32 %v813, %v955
        %v1000 = vadd.f32 %v818, %v960
        %v1001 = vadd.f32 %v823, %v965
        %v1002 = vadd.f32 %v828, %v970
        %v1003 = vadd.f32 %v833, %v975
        %v1004 = vadd.f32 %v838, %v980
        %v1005 = vadd.f32 %v843, %v985
        %v1006 = vadd.f32 %v848, %v990
        %v1007 = vadd.f32 %v853, %v995
        %v1008 = vld [vmem:[#allocation3 + $0x10] sm:$0xff]
        %v1009 = vld [vmem:[#allocation3 + $0x18] sm:$0xff]
        %v1010 = vld [vmem:[#allocation3 + $0x20] sm:$0xff]
        %v1011 = vld [vmem:[#allocation3 + $0x28] sm:$0xff]
        %v1012 = vld [vmem:[#allocation3 + $0x30] sm:$0xff]
        %v1013 = vld [vmem:[#allocation3 + $0x38] sm:$0xff]
        %v1014 = vld [vmem:[#allocation3 + $0x40] sm:$0xff]
        %v1015 = vld [vmem:[#allocation3 + $0x48] sm:$0xff]
        %v1016 = vld [vmem:[#allocation3 + $0x50] sm:$0xff]
        %v1017 = vld [vmem:[#allocation3 + $0x58] sm:$0xff]
        %s1018 = scalar_lea.vmem [#allocation8], 384
        %v1019 = vld [vmem:[%s1018] sm:$0xff]
        %v1020 = vld [vmem:[%s1018 + $0x8] sm:$0xff]
        %v1021 = vld [vmem:[%s1018 + $0x10] sm:$0xff]
        %v1022 = vld [vmem:[%s1018 + $0x18] sm:$0xff]
        %v1023 = vld [vmem:[%s1018 + $0x20] sm:$0xff]
        %v1024 = vld [vmem:[%s1018 + $0x28] sm:$0xff]
        %v1025 = vld [vmem:[%s1018 + $0x30] sm:$0xff]
        %v1026 = vld [vmem:[%s1018 + $0x38] sm:$0xff]
        %v1027 = vld [vmem:[%s1018 + $0x40] sm:$0xff]
        %v1028 = vld [vmem:[%s1018 + $0x48] sm:$0xff]
        %v1029 = vld [vmem:[%s1018 + $0x50] sm:$0xff]
        %v1030 = vld [vmem:[%s1018 + $0x58] sm:$0xff]
        %v1031 = vld [vmem:[%s1018 + $0x60] sm:$0xff]
        %v1032 = vld [vmem:[%s1018 + $0x68] sm:$0xff]
        %v1033 = vld [vmem:[%s1018 + $0x70] sm:$0xff]
        %v1034 = vld [vmem:[%s1018 + $0x78] sm:$0xff]
        %1035 = vmatprep.subr.mxu0 0.0
        %1036 = vmatpush1.msra.mxu0 %v1034
        %1037 = vmatprep.subr.mxu0 0.0
        %1038 = vmatpush1.msra.mxu0 %v1033
        %1039 = vmatprep.subr.mxu0 0.0
        %1040 = vmatpush1.msra.mxu0 %v1032
        %1041 = vmatprep.subr.mxu0 0.0
        %1042 = vmatpush1.msra.mxu0 %v1031
        %1043 = vmatprep.subr.mxu0 0.0
        %1044 = vmatpush1.msra.mxu0 %v1030
        %1045 = vmatprep.subr.mxu0 0.0
        %1046 = vmatpush1.msra.mxu0 %v1029
        %1047 = vmatprep.subr.mxu0 0.0
        %1048 = vmatpush1.msra.mxu0 %v1028
        %1049 = vmatprep.subr.mxu0 0.0
        %1050 = vmatpush1.msra.mxu0 %v1027
        %1051 = vmatprep.subr.mxu0 0.0
        %1052 = vmatpush1.msra.mxu0 %v1026
        %1053 = vmatprep.subr.mxu0 0.0
        %1054 = vmatpush1.msra.mxu0 %v1025
        %1055 = vmatprep.subr.mxu0 0.0
        %1056 = vmatpush1.msra.mxu0 %v1024
        %1057 = vmatprep.subr.mxu0 0.0
        %1058 = vmatpush1.msra.mxu0 %v1023
        %1059 = vmatprep.subr.mxu0 0.0
        %1060 = vmatpush1.msra.mxu0 %v1022
        %1061 = vmatprep.subr.mxu0 0.0
        %1062 = vmatpush1.msra.mxu0 %v1021
        %1063 = vmatprep.subr.mxu0 0.0
        %1064 = vmatpush1.msra.mxu0 %v1020
        %1065 = vmatprep.subr.mxu0 0.0
        %1066 = vmatpush1.msra.mxu0 %v1019
        %1067 = vmatprep.subr.mxu0 0.0
        %1068 = vmatpush2.msra.mxu0 0.0
        %1069 = vmatprep.subr.mxu0 0.0
        %1070 = vmatpush2.msra.mxu0 0.0
        %1071 = vmatprep.subr.mxu0 0.0
        %1072 = vmatpush2.msra.mxu0 0.0
        %1073 = vmatprep.subr.mxu0 0.0
        %1074 = vmatpush2.msra.mxu0 0.0
        %1075 = vmatprep.subr.mxu0 0.0
        %1076 = vmatpush2.msra.mxu0 0.0
        %1077 = vmatprep.subr.mxu0 0.0
        %1078 = vmatpush2.msra.mxu0 0.0
        %1079 = vmatprep.subr.mxu0 0.0
        %1080 = vmatpush2.msra.mxu0 0.0
        %1081 = vmatprep.subr.mxu0 0.0
        %1082 = vmatpush2.msra.mxu0 0.0
        %1083 = vmatprep.subr.mxu0 0.0
        %1084 = vmatpush2.msra.mxu0 0.0
        %1085 = vmatprep.subr.mxu0 0.0
        %1086 = vmatpush2.msra.mxu0 0.0
        %1087 = vmatprep.subr.mxu0 0.0
        %1088 = vmatpush2.msra.mxu0 0.0
        %1089 = vmatprep.subr.mxu0 0.0
        %1090 = vmatpush2.msra.mxu0 0.0
        %1091 = vmatprep.subr.mxu0 0.0
        %1092 = vmatpush2.msra.mxu0 0.0
        %1093 = vmatprep.subr.mxu0 0.0
        %1094 = vmatpush2.msra.mxu0 0.0
        %1095 = vmatprep.subr.mxu0 0.0
        %1096 = vmatpush2.msra.mxu0 0.0
        %1097 = vmatprep.subr.mxu0 0.0
        %1098 = vmatpush2.msra.mxu0 0.0
        %1099 = vmatprep.mubr.f32.mxu0 0.0
        %1100 = vmatmul.mubr.f32.gmra.mxu0 %v1008
        %v1101 = vpop.f32.mrf.mxu0
        %v1102 = vadd.f32 0.0, %v1101
        %v1103 = vpop.f32.mrf.mxu0
        %1104 = vmatprep.mubr.f32.mxu0 0.0
        %1105 = vmatmul.mubr.f32.gmra.mxu0 %v1009
        %v1106 = vpop.f32.mrf.mxu0
        %v1107 = vadd.f32 0.0, %v1106
        %v1108 = vpop.f32.mrf.mxu0
        %1109 = vmatprep.mubr.f32.mxu0 0.0
        %1110 = vmatmul.mubr.f32.gmra.mxu0 %v1010
        %v1111 = vpop.f32.mrf.mxu0
        %v1112 = vadd.f32 0.0, %v1111
        %v1113 = vpop.f32.mrf.mxu0
        %1114 = vmatprep.mubr.f32.mxu0 0.0
        %1115 = vmatmul.mubr.f32.gmra.mxu0 %v1011
        %v1116 = vpop.f32.mrf.mxu0
        %v1117 = vadd.f32 0.0, %v1116
        %v1118 = vpop.f32.mrf.mxu0
        %1119 = vmatprep.mubr.f32.mxu0 0.0
        %1120 = vmatmul.mubr.f32.gmra.mxu0 %v1012
        %v1121 = vpop.f32.mrf.mxu0
        %v1122 = vadd.f32 0.0, %v1121
        %v1123 = vpop.f32.mrf.mxu0
        %1124 = vmatprep.mubr.f32.mxu0 0.0
        %1125 = vmatmul.mubr.f32.gmra.mxu0 %v1013
        %v1126 = vpop.f32.mrf.mxu0
        %v1127 = vadd.f32 0.0, %v1126
        %v1128 = vpop.f32.mrf.mxu0
        %1129 = vmatprep.mubr.f32.mxu0 0.0
        %1130 = vmatmul.mubr.f32.gmra.mxu0 %v1014
        %v1131 = vpop.f32.mrf.mxu0
        %v1132 = vadd.f32 0.0, %v1131
        %v1133 = vpop.f32.mrf.mxu0
        %1134 = vmatprep.mubr.f32.mxu0 0.0
        %1135 = vmatmul.mubr.f32.gmra.mxu0 %v1015
        %v1136 = vpop.f32.mrf.mxu0
        %v1137 = vadd.f32 0.0, %v1136
        %v1138 = vpop.f32.mrf.mxu0
        %1139 = vmatprep.mubr.f32.mxu0 0.0
        %1140 = vmatmul.mubr.f32.gmra.mxu0 %v1016
        %v1141 = vpop.f32.mrf.mxu0
        %v1142 = vadd.f32 0.0, %v1141
        %v1143 = vpop.f32.mrf.mxu0
        %1144 = vmatprep.mubr.f32.mxu0 0.0
        %1145 = vmatmul.mubr.f32.gmra.mxu0 %v1017
        %v1146 = vpop.f32.mrf.mxu0
        %v1147 = vadd.f32 0.0, %v1146
        %v1148 = vpop.f32.mrf.mxu0
        %1149 = vdwg.mxu0
        %v1150 = vadd.f32 %v998, %v1102
        %v1151 = vadd.f32 %v999, %v1107
        %v1152 = vadd.f32 %v1000, %v1112
        %v1153 = vadd.f32 %v1001, %v1117
        %v1154 = vadd.f32 %v1002, %v1122
        %v1155 = vadd.f32 %v1003, %v1127
        %v1156 = vadd.f32 %v1004, %v1132
        %v1157 = vadd.f32 %v1005, %v1137
        %v1158 = vadd.f32 %v1006, %v1142
        %v1159 = vadd.f32 %v1007, %v1147
        %v1160 = vld [vmem:[#allocation3 + $0x11] sm:$0xff]
        %v1161 = vld [vmem:[#allocation3 + $0x19] sm:$0xff]
        %v1162 = vld [vmem:[#allocation3 + $0x21] sm:$0xff]
        %v1163 = vld [vmem:[#allocation3 + $0x29] sm:$0xff]
        %v1164 = vld [vmem:[#allocation3 + $0x31] sm:$0xff]
        %v1165 = vld [vmem:[#allocation3 + $0x39] sm:$0xff]
        %v1166 = vld [vmem:[#allocation3 + $0x41] sm:$0xff]
        %v1167 = vld [vmem:[#allocation3 + $0x49] sm:$0xff]
        %v1168 = vld [vmem:[#allocation3 + $0x51] sm:$0xff]
        %v1169 = vld [vmem:[#allocation3 + $0x59] sm:$0xff]
        %s1170 = scalar_lea.vmem [#allocation8], 512
        %v1171 = vld [vmem:[%s1170] sm:$0xff]
        %v1172 = vld [vmem:[%s1170 + $0x8] sm:$0xff]
        %v1173 = vld [vmem:[%s1170 + $0x10] sm:$0xff]
        %v1174 = vld [vmem:[%s1170 + $0x18] sm:$0xff]
        %v1175 = vld [vmem:[%s1170 + $0x20] sm:$0xff]
        %v1176 = vld [vmem:[%s1170 + $0x28] sm:$0xff]
        %v1177 = vld [vmem:[%s1170 + $0x30] sm:$0xff]
        %v1178 = vld [vmem:[%s1170 + $0x38] sm:$0xff]
        %v1179 = vld [vmem:[%s1170 + $0x40] sm:$0xff]
        %v1180 = vld [vmem:[%s1170 + $0x48] sm:$0xff]
        %v1181 = vld [vmem:[%s1170 + $0x50] sm:$0xff]
        %v1182 = vld [vmem:[%s1170 + $0x58] sm:$0xff]
        %v1183 = vld [vmem:[%s1170 + $0x60] sm:$0xff]
        %v1184 = vld [vmem:[%s1170 + $0x68] sm:$0xff]
        %v1185 = vld [vmem:[%s1170 + $0x70] sm:$0xff]
        %v1186 = vld [vmem:[%s1170 + $0x78] sm:$0xff]
        %1187 = vmatprep.subr.mxu0 0.0
        %1188 = vmatpush1.msra.mxu0 %v1186
        %1189 = vmatprep.subr.mxu0 0.0
        %1190 = vmatpush1.msra.mxu0 %v1185
        %1191 = vmatprep.subr.mxu0 0.0
        %1192 = vmatpush1.msra.mxu0 %v1184
        %1193 = vmatprep.subr.mxu0 0.0
        %1194 = vmatpush1.msra.mxu0 %v1183
        %1195 = vmatprep.subr.mxu0 0.0
        %1196 = vmatpush1.msra.mxu0 %v1182
        %1197 = vmatprep.subr.mxu0 0.0
        %1198 = vmatpush1.msra.mxu0 %v1181
        %1199 = vmatprep.subr.mxu0 0.0
        %1200 = vmatpush1.msra.mxu0 %v1180
        %1201 = vmatprep.subr.mxu0 0.0
        %1202 = vmatpush1.msra.mxu0 %v1179
        %1203 = vmatprep.subr.mxu0 0.0
        %1204 = vmatpush1.msra.mxu0 %v1178
        %1205 = vmatprep.subr.mxu0 0.0
        %1206 = vmatpush1.msra.mxu0 %v1177
        %1207 = vmatprep.subr.mxu0 0.0
        %1208 = vmatpush1.msra.mxu0 %v1176
        %1209 = vmatprep.subr.mxu0 0.0
        %1210 = vmatpush1.msra.mxu0 %v1175
        %1211 = vmatprep.subr.mxu0 0.0
        %1212 = vmatpush1.msra.mxu0 %v1174
        %1213 = vmatprep.subr.mxu0 0.0
        %1214 = vmatpush1.msra.mxu0 %v1173
        %1215 = vmatprep.subr.mxu0 0.0
        %1216 = vmatpush1.msra.mxu0 %v1172
        %1217 = vmatprep.subr.mxu0 0.0
        %1218 = vmatpush1.msra.mxu0 %v1171
        %1219 = vmatprep.subr.mxu0 0.0
        %1220 = vmatpush2.msra.mxu0 0.0
        %1221 = vmatprep.subr.mxu0 0.0
        %1222 = vmatpush2.msra.mxu0 0.0
        %1223 = vmatprep.subr.mxu0 0.0
        %1224 = vmatpush2.msra.mxu0 0.0
        %1225 = vmatprep.subr.mxu0 0.0
        %1226 = vmatpush2.msra.mxu0 0.0
        %1227 = vmatprep.subr.mxu0 0.0
        %1228 = vmatpush2.msra.mxu0 0.0
        %1229 = vmatprep.subr.mxu0 0.0
        %1230 = vmatpush2.msra.mxu0 0.0
        %1231 = vmatprep.subr.mxu0 0.0
        %1232 = vmatpush2.msra.mxu0 0.0
        %1233 = vmatprep.subr.mxu0 0.0
        %1234 = vmatpush2.msra.mxu0 0.0
        %1235 = vmatprep.subr.mxu0 0.0
        %1236 = vmatpush2.msra.mxu0 0.0
        %1237 = vmatprep.subr.mxu0 0.0
        %1238 = vmatpush2.msra.mxu0 0.0
        %1239 = vmatprep.subr.mxu0 0.0
        %1240 = vmatpush2.msra.mxu0 0.0
        %1241 = vmatprep.subr.mxu0 0.0
        %1242 = vmatpush2.msra.mxu0 0.0
        %1243 = vmatprep.subr.mxu0 0.0
        %1244 = vmatpush2.msra.mxu0 0.0
        %1245 = vmatprep.subr.mxu0 0.0
        %1246 = vmatpush2.msra.mxu0 0.0
        %1247 = vmatprep.subr.mxu0 0.0
        %1248 = vmatpush2.msra.mxu0 0.0
        %1249 = vmatprep.subr.mxu0 0.0
        %1250 = vmatpush2.msra.mxu0 0.0
        %1251 = vmatprep.mubr.f32.mxu0 0.0
        %1252 = vmatmul.mubr.f32.gmra.mxu0 %v1160
        %v1253 = vpop.f32.mrf.mxu0
        %v1254 = vadd.f32 0.0, %v1253
        %v1255 = vpop.f32.mrf.mxu0
        %1256 = vmatprep.mubr.f32.mxu0 0.0
        %1257 = vmatmul.mubr.f32.gmra.mxu0 %v1161
        %v1258 = vpop.f32.mrf.mxu0
        %v1259 = vadd.f32 0.0, %v1258
        %v1260 = vpop.f32.mrf.mxu0
        %1261 = vmatprep.mubr.f32.mxu0 0.0
        %1262 = vmatmul.mubr.f32.gmra.mxu0 %v1162
        %v1263 = vpop.f32.mrf.mxu0
        %v1264 = vadd.f32 0.0, %v1263
        %v1265 = vpop.f32.mrf.mxu0
        %1266 = vmatprep.mubr.f32.mxu0 0.0
        %1267 = vmatmul.mubr.f32.gmra.mxu0 %v1163
        %v1268 = vpop.f32.mrf.mxu0
        %v1269 = vadd.f32 0.0, %v1268
        %v1270 = vpop.f32.mrf.mxu0
        %1271 = vmatprep.mubr.f32.mxu0 0.0
        %1272 = vmatmul.mubr.f32.gmra.mxu0 %v1164
        %v1273 = vpop.f32.mrf.mxu0
        %v1274 = vadd.f32 0.0, %v1273
        %v1275 = vpop.f32.mrf.mxu0
        %1276 = vmatprep.mubr.f32.mxu0 0.0
        %1277 = vmatmul.mubr.f32.gmra.mxu0 %v1165
        %v1278 = vpop.f32.mrf.mxu0
        %v1279 = vadd.f32 0.0, %v1278
        %v1280 = vpop.f32.mrf.mxu0
        %1281 = vmatprep.mubr.f32.mxu0 0.0
        %1282 = vmatmul.mubr.f32.gmra.mxu0 %v1166
        %v1283 = vpop.f32.mrf.mxu0
        %v1284 = vadd.f32 0.0, %v1283
        %v1285 = vpop.f32.mrf.mxu0
        %1286 = vmatprep.mubr.f32.mxu0 0.0
        %1287 = vmatmul.mubr.f32.gmra.mxu0 %v1167
        %v1288 = vpop.f32.mrf.mxu0
        %v1289 = vadd.f32 0.0, %v1288
        %v1290 = vpop.f32.mrf.mxu0
        %1291 = vmatprep.mubr.f32.mxu0 0.0
        %1292 = vmatmul.mubr.f32.gmra.mxu0 %v1168
        %v1293 = vpop.f32.mrf.mxu0
        %v1294 = vadd.f32 0.0, %v1293
        %v1295 = vpop.f32.mrf.mxu0
        %1296 = vmatprep.mubr.f32.mxu0 0.0
        %1297 = vmatmul.mubr.f32.gmra.mxu0 %v1169
        %v1298 = vpop.f32.mrf.mxu0
        %v1299 = vadd.f32 0.0, %v1298
        %v1300 = vpop.f32.mrf.mxu0
        %1301 = vdwg.mxu0
        %v1302 = vadd.f32 %v1150, %v1254
        %v1303 = vadd.f32 %v1151, %v1259
        %v1304 = vadd.f32 %v1152, %v1264
        %v1305 = vadd.f32 %v1153, %v1269
        %v1306 = vadd.f32 %v1154, %v1274
        %v1307 = vadd.f32 %v1155, %v1279
        %v1308 = vadd.f32 %v1156, %v1284
        %v1309 = vadd.f32 %v1157, %v1289
        %v1310 = vadd.f32 %v1158, %v1294
        %v1311 = vadd.f32 %v1159, %v1299
        %v1312 = vld [vmem:[#allocation3 + $0x12] sm:$0xff]
        %v1313 = vld [vmem:[#allocation3 + $0x1a] sm:$0xff]
        %v1314 = vld [vmem:[#allocation3 + $0x22] sm:$0xff]
        %v1315 = vld [vmem:[#allocation3 + $0x2a] sm:$0xff]
        %v1316 = vld [vmem:[#allocation3 + $0x32] sm:$0xff]
        %v1317 = vld [vmem:[#allocation3 + $0x3a] sm:$0xff]
        %v1318 = vld [vmem:[#allocation3 + $0x42] sm:$0xff]
        %v1319 = vld [vmem:[#allocation3 + $0x4a] sm:$0xff]
        %v1320 = vld [vmem:[#allocation3 + $0x52] sm:$0xff]
        %v1321 = vld [vmem:[#allocation3 + $0x5a] sm:$0xff]
        %s1322 = scalar_lea.vmem [#allocation8], 640
        %v1323 = vld [vmem:[%s1322] sm:$0xff]
        %v1324 = vld [vmem:[%s1322 + $0x8] sm:$0xff]
        %v1325 = vld [vmem:[%s1322 + $0x10] sm:$0xff]
        %v1326 = vld [vmem:[%s1322 + $0x18] sm:$0xff]
        %v1327 = vld [vmem:[%s1322 + $0x20] sm:$0xff]
        %v1328 = vld [vmem:[%s1322 + $0x28] sm:$0xff]
        %v1329 = vld [vmem:[%s1322 + $0x30] sm:$0xff]
        %v1330 = vld [vmem:[%s1322 + $0x38] sm:$0xff]
        %v1331 = vld [vmem:[%s1322 + $0x40] sm:$0xff]
        %v1332 = vld [vmem:[%s1322 + $0x48] sm:$0xff]
        %v1333 = vld [vmem:[%s1322 + $0x50] sm:$0xff]
        %v1334 = vld [vmem:[%s1322 + $0x58] sm:$0xff]
        %v1335 = vld [vmem:[%s1322 + $0x60] sm:$0xff]
        %v1336 = vld [vmem:[%s1322 + $0x68] sm:$0xff]
        %v1337 = vld [vmem:[%s1322 + $0x70] sm:$0xff]
        %v1338 = vld [vmem:[%s1322 + $0x78] sm:$0xff]
        %1339 = vmatprep.subr.mxu0 0.0
        %1340 = vmatpush1.msra.mxu0 %v1338
        %1341 = vmatprep.subr.mxu0 0.0
        %1342 = vmatpush1.msra.mxu0 %v1337
        %1343 = vmatprep.subr.mxu0 0.0
        %1344 = vmatpush1.msra.mxu0 %v1336
        %1345 = vmatprep.subr.mxu0 0.0
        %1346 = vmatpush1.msra.mxu0 %v1335
        %1347 = vmatprep.subr.mxu0 0.0
        %1348 = vmatpush1.msra.mxu0 %v1334
        %1349 = vmatprep.subr.mxu0 0.0
        %1350 = vmatpush1.msra.mxu0 %v1333
        %1351 = vmatprep.subr.mxu0 0.0
        %1352 = vmatpush1.msra.mxu0 %v1332
        %1353 = vmatprep.subr.mxu0 0.0
        %1354 = vmatpush1.msra.mxu0 %v1331
        %1355 = vmatprep.subr.mxu0 0.0
        %1356 = vmatpush1.msra.mxu0 %v1330
        %1357 = vmatprep.subr.mxu0 0.0
        %1358 = vmatpush1.msra.mxu0 %v1329
        %1359 = vmatprep.subr.mxu0 0.0
        %1360 = vmatpush1.msra.mxu0 %v1328
        %1361 = vmatprep.subr.mxu0 0.0
        %1362 = vmatpush1.msra.mxu0 %v1327
        %1363 = vmatprep.subr.mxu0 0.0
        %1364 = vmatpush1.msra.mxu0 %v1326
        %1365 = vmatprep.subr.mxu0 0.0
        %1366 = vmatpush1.msra.mxu0 %v1325
        %1367 = vmatprep.subr.mxu0 0.0
        %1368 = vmatpush1.msra.mxu0 %v1324
        %1369 = vmatprep.subr.mxu0 0.0
        %1370 = vmatpush1.msra.mxu0 %v1323
        %1371 = vmatprep.subr.mxu0 0.0
        %1372 = vmatpush2.msra.mxu0 0.0
        %1373 = vmatprep.subr.mxu0 0.0
        %1374 = vmatpush2.msra.mxu0 0.0
        %1375 = vmatprep.subr.mxu0 0.0
        %1376 = vmatpush2.msra.mxu0 0.0
        %1377 = vmatprep.subr.mxu0 0.0
        %1378 = vmatpush2.msra.mxu0 0.0
        %1379 = vmatprep.subr.mxu0 0.0
        %1380 = vmatpush2.msra.mxu0 0.0
        %1381 = vmatprep.subr.mxu0 0.0
        %1382 = vmatpush2.msra.mxu0 0.0
        %1383 = vmatprep.subr.mxu0 0.0
        %1384 = vmatpush2.msra.mxu0 0.0
        %1385 = vmatprep.subr.mxu0 0.0
        %1386 = vmatpush2.msra.mxu0 0.0
        %1387 = vmatprep.subr.mxu0 0.0
        %1388 = vmatpush2.msra.mxu0 0.0
        %1389 = vmatprep.subr.mxu0 0.0
        %1390 = vmatpush2.msra.mxu0 0.0
        %1391 = vmatprep.subr.mxu0 0.0
        %1392 = vmatpush2.msra.mxu0 0.0
        %1393 = vmatprep.subr.mxu0 0.0
        %1394 = vmatpush2.msra.mxu0 0.0
        %1395 = vmatprep.subr.mxu0 0.0
        %1396 = vmatpush2.msra.mxu0 0.0
        %1397 = vmatprep.subr.mxu0 0.0
        %1398 = vmatpush2.msra.mxu0 0.0
        %1399 = vmatprep.subr.mxu0 0.0
        %1400 = vmatpush2.msra.mxu0 0.0
        %1401 = vmatprep.subr.mxu0 0.0
        %1402 = vmatpush2.msra.mxu0 0.0
        %1403 = vmatprep.mubr.f32.mxu0 0.0
        %1404 = vmatmul.mubr.f32.gmra.mxu0 %v1312
        %v1405 = vpop.f32.mrf.mxu0
        %v1406 = vadd.f32 0.0, %v1405
        %v1407 = vpop.f32.mrf.mxu0
        %1408 = vmatprep.mubr.f32.mxu0 0.0
        %1409 = vmatmul.mubr.f32.gmra.mxu0 %v1313
        %v1410 = vpop.f32.mrf.mxu0
        %v1411 = vadd.f32 0.0, %v1410
        %v1412 = vpop.f32.mrf.mxu0
        %1413 = vmatprep.mubr.f32.mxu0 0.0
        %1414 = vmatmul.mubr.f32.gmra.mxu0 %v1314
        %v1415 = vpop.f32.mrf.mxu0
        %v1416 = vadd.f32 0.0, %v1415
        %v1417 = vpop.f32.mrf.mxu0
        %1418 = vmatprep.mubr.f32.mxu0 0.0
        %1419 = vmatmul.mubr.f32.gmra.mxu0 %v1315
        %v1420 = vpop.f32.mrf.mxu0
        %v1421 = vadd.f32 0.0, %v1420
        %v1422 = vpop.f32.mrf.mxu0
        %1423 = vmatprep.mubr.f32.mxu0 0.0
        %1424 = vmatmul.mubr.f32.gmra.mxu0 %v1316
        %v1425 = vpop.f32.mrf.mxu0
        %v1426 = vadd.f32 0.0, %v1425
        %v1427 = vpop.f32.mrf.mxu0
        %1428 = vmatprep.mubr.f32.mxu0 0.0
        %1429 = vmatmul.mubr.f32.gmra.mxu0 %v1317
        %v1430 = vpop.f32.mrf.mxu0
        %v1431 = vadd.f32 0.0, %v1430
        %v1432 = vpop.f32.mrf.mxu0
        %1433 = vmatprep.mubr.f32.mxu0 0.0
        %1434 = vmatmul.mubr.f32.gmra.mxu0 %v1318
        %v1435 = vpop.f32.mrf.mxu0
        %v1436 = vadd.f32 0.0, %v1435
        %v1437 = vpop.f32.mrf.mxu0
        %1438 = vmatprep.mubr.f32.mxu0 0.0
        %1439 = vmatmul.mubr.f32.gmra.mxu0 %v1319
        %v1440 = vpop.f32.mrf.mxu0
        %v1441 = vadd.f32 0.0, %v1440
        %v1442 = vpop.f32.mrf.mxu0
        %1443 = vmatprep.mubr.f32.mxu0 0.0
        %1444 = vmatmul.mubr.f32.gmra.mxu0 %v1320
        %v1445 = vpop.f32.mrf.mxu0
        %v1446 = vadd.f32 0.0, %v1445
        %v1447 = vpop.f32.mrf.mxu0
        %1448 = vmatprep.mubr.f32.mxu0 0.0
        %1449 = vmatmul.mubr.f32.gmra.mxu0 %v1321
        %v1450 = vpop.f32.mrf.mxu0
        %v1451 = vadd.f32 0.0, %v1450
        %v1452 = vpop.f32.mrf.mxu0
        %1453 = vdwg.mxu0
        %v1454 = vadd.f32 %v1302, %v1406
        %v1455 = vadd.f32 %v1303, %v1411
        %v1456 = vadd.f32 %v1304, %v1416
        %v1457 = vadd.f32 %v1305, %v1421
        %v1458 = vadd.f32 %v1306, %v1426
        %v1459 = vadd.f32 %v1307, %v1431
        %v1460 = vadd.f32 %v1308, %v1436
        %v1461 = vadd.f32 %v1309, %v1441
        %v1462 = vadd.f32 %v1310, %v1446
        %v1463 = vadd.f32 %v1311, %v1451
        %v1464 = vld [vmem:[#allocation3 + $0x20] sm:$0xff]
        %v1465 = vld [vmem:[#allocation3 + $0x28] sm:$0xff]
        %v1466 = vld [vmem:[#allocation3 + $0x30] sm:$0xff]
        %v1467 = vld [vmem:[#allocation3 + $0x38] sm:$0xff]
        %v1468 = vld [vmem:[#allocation3 + $0x40] sm:$0xff]
        %v1469 = vld [vmem:[#allocation3 + $0x48] sm:$0xff]
        %v1470 = vld [vmem:[#allocation3 + $0x50] sm:$0xff]
        %v1471 = vld [vmem:[#allocation3 + $0x58] sm:$0xff]
        %v1472 = vld [vmem:[#allocation3 + $0x60] sm:$0xff]
        %v1473 = vld [vmem:[#allocation3 + $0x68] sm:$0xff]
        %s1474 = scalar_lea.vmem [#allocation8], 768
        %v1475 = vld [vmem:[%s1474] sm:$0xff]
        %v1476 = vld [vmem:[%s1474 + $0x8] sm:$0xff]
        %v1477 = vld [vmem:[%s1474 + $0x10] sm:$0xff]
        %v1478 = vld [vmem:[%s1474 + $0x18] sm:$0xff]
        %v1479 = vld [vmem:[%s1474 + $0x20] sm:$0xff]
        %v1480 = vld [vmem:[%s1474 + $0x28] sm:$0xff]
        %v1481 = vld [vmem:[%s1474 + $0x30] sm:$0xff]
        %v1482 = vld [vmem:[%s1474 + $0x38] sm:$0xff]
        %v1483 = vld [vmem:[%s1474 + $0x40] sm:$0xff]
        %v1484 = vld [vmem:[%s1474 + $0x48] sm:$0xff]
        %v1485 = vld [vmem:[%s1474 + $0x50] sm:$0xff]
        %v1486 = vld [vmem:[%s1474 + $0x58] sm:$0xff]
        %v1487 = vld [vmem:[%s1474 + $0x60] sm:$0xff]
        %v1488 = vld [vmem:[%s1474 + $0x68] sm:$0xff]
        %v1489 = vld [vmem:[%s1474 + $0x70] sm:$0xff]
        %v1490 = vld [vmem:[%s1474 + $0x78] sm:$0xff]
        %1491 = vmatprep.subr.mxu0 0.0
        %1492 = vmatpush1.msra.mxu0 %v1490
        %1493 = vmatprep.subr.mxu0 0.0
        %1494 = vmatpush1.msra.mxu0 %v1489
        %1495 = vmatprep.subr.mxu0 0.0
        %1496 = vmatpush1.msra.mxu0 %v1488
        %1497 = vmatprep.subr.mxu0 0.0
        %1498 = vmatpush1.msra.mxu0 %v1487
        %1499 = vmatprep.subr.mxu0 0.0
        %1500 = vmatpush1.msra.mxu0 %v1486
        %1501 = vmatprep.subr.mxu0 0.0
        %1502 = vmatpush1.msra.mxu0 %v1485
        %1503 = vmatprep.subr.mxu0 0.0
        %1504 = vmatpush1.msra.mxu0 %v1484
        %1505 = vmatprep.subr.mxu0 0.0
        %1506 = vmatpush1.msra.mxu0 %v1483
        %1507 = vmatprep.subr.mxu0 0.0
        %1508 = vmatpush1.msra.mxu0 %v1482
        %1509 = vmatprep.subr.mxu0 0.0
        %1510 = vmatpush1.msra.mxu0 %v1481
        %1511 = vmatprep.subr.mxu0 0.0
        %1512 = vmatpush1.msra.mxu0 %v1480
        %1513 = vmatprep.subr.mxu0 0.0
        %1514 = vmatpush1.msra.mxu0 %v1479
        %1515 = vmatprep.subr.mxu0 0.0
        %1516 = vmatpush1.msra.mxu0 %v1478
        %1517 = vmatprep.subr.mxu0 0.0
        %1518 = vmatpush1.msra.mxu0 %v1477
        %1519 = vmatprep.subr.mxu0 0.0
        %1520 = vmatpush1.msra.mxu0 %v1476
        %1521 = vmatprep.subr.mxu0 0.0
        %1522 = vmatpush1.msra.mxu0 %v1475
        %1523 = vmatprep.subr.mxu0 0.0
        %1524 = vmatpush2.msra.mxu0 0.0
        %1525 = vmatprep.subr.mxu0 0.0
        %1526 = vmatpush2.msra.mxu0 0.0
        %1527 = vmatprep.subr.mxu0 0.0
        %1528 = vmatpush2.msra.mxu0 0.0
        %1529 = vmatprep.subr.mxu0 0.0
        %1530 = vmatpush2.msra.mxu0 0.0
        %1531 = vmatprep.subr.mxu0 0.0
        %1532 = vmatpush2.msra.mxu0 0.0
        %1533 = vmatprep.subr.mxu0 0.0
        %1534 = vmatpush2.msra.mxu0 0.0
        %1535 = vmatprep.subr.mxu0 0.0
        %1536 = vmatpush2.msra.mxu0 0.0
        %1537 = vmatprep.subr.mxu0 0.0
        %1538 = vmatpush2.msra.mxu0 0.0
        %1539 = vmatprep.subr.mxu0 0.0
        %1540 = vmatpush2.msra.mxu0 0.0
        %1541 = vmatprep.subr.mxu0 0.0
        %1542 = vmatpush2.msra.mxu0 0.0
        %1543 = vmatprep.subr.mxu0 0.0
        %1544 = vmatpush2.msra.mxu0 0.0
        %1545 = vmatprep.subr.mxu0 0.0
        %1546 = vmatpush2.msra.mxu0 0.0
        %1547 = vmatprep.subr.mxu0 0.0
        %1548 = vmatpush2.msra.mxu0 0.0
        %1549 = vmatprep.subr.mxu0 0.0
        %1550 = vmatpush2.msra.mxu0 0.0
        %1551 = vmatprep.subr.mxu0 0.0
        %1552 = vmatpush2.msra.mxu0 0.0
        %1553 = vmatprep.subr.mxu0 0.0
        %1554 = vmatpush2.msra.mxu0 0.0
        %1555 = vmatprep.mubr.f32.mxu0 0.0
        %1556 = vmatmul.mubr.f32.gmra.mxu0 %v1464
        %v1557 = vpop.f32.mrf.mxu0
        %v1558 = vadd.f32 0.0, %v1557
        %v1559 = vpop.f32.mrf.mxu0
        %1560 = vmatprep.mubr.f32.mxu0 0.0
        %1561 = vmatmul.mubr.f32.gmra.mxu0 %v1465
        %v1562 = vpop.f32.mrf.mxu0
        %v1563 = vadd.f32 0.0, %v1562
        %v1564 = vpop.f32.mrf.mxu0
        %1565 = vmatprep.mubr.f32.mxu0 0.0
        %1566 = vmatmul.mubr.f32.gmra.mxu0 %v1466
        %v1567 = vpop.f32.mrf.mxu0
        %v1568 = vadd.f32 0.0, %v1567
        %v1569 = vpop.f32.mrf.mxu0
        %1570 = vmatprep.mubr.f32.mxu0 0.0
        %1571 = vmatmul.mubr.f32.gmra.mxu0 %v1467
        %v1572 = vpop.f32.mrf.mxu0
        %v1573 = vadd.f32 0.0, %v1572
        %v1574 = vpop.f32.mrf.mxu0
        %1575 = vmatprep.mubr.f32.mxu0 0.0
        %1576 = vmatmul.mubr.f32.gmra.mxu0 %v1468
        %v1577 = vpop.f32.mrf.mxu0
        %v1578 = vadd.f32 0.0, %v1577
        %v1579 = vpop.f32.mrf.mxu0
        %1580 = vmatprep.mubr.f32.mxu0 0.0
        %1581 = vmatmul.mubr.f32.gmra.mxu0 %v1469
        %v1582 = vpop.f32.mrf.mxu0
        %v1583 = vadd.f32 0.0, %v1582
        %v1584 = vpop.f32.mrf.mxu0
        %1585 = vmatprep.mubr.f32.mxu0 0.0
        %1586 = vmatmul.mubr.f32.gmra.mxu0 %v1470
        %v1587 = vpop.f32.mrf.mxu0
        %v1588 = vadd.f32 0.0, %v1587
        %v1589 = vpop.f32.mrf.mxu0
        %1590 = vmatprep.mubr.f32.mxu0 0.0
        %1591 = vmatmul.mubr.f32.gmra.mxu0 %v1471
        %v1592 = vpop.f32.mrf.mxu0
        %v1593 = vadd.f32 0.0, %v1592
        %v1594 = vpop.f32.mrf.mxu0
        %1595 = vmatprep.mubr.f32.mxu0 0.0
        %1596 = vmatmul.mubr.f32.gmra.mxu0 %v1472
        %v1597 = vpop.f32.mrf.mxu0
        %v1598 = vadd.f32 0.0, %v1597
        %v1599 = vpop.f32.mrf.mxu0
        %1600 = vmatprep.mubr.f32.mxu0 0.0
        %1601 = vmatmul.mubr.f32.gmra.mxu0 %v1473
        %v1602 = vpop.f32.mrf.mxu0
        %v1603 = vadd.f32 0.0, %v1602
        %v1604 = vpop.f32.mrf.mxu0
        %1605 = vdwg.mxu0
        %v1606 = vadd.f32 %v1454, %v1558
        %v1607 = vadd.f32 %v1455, %v1563
        %v1608 = vadd.f32 %v1456, %v1568
        %v1609 = vadd.f32 %v1457, %v1573
        %v1610 = vadd.f32 %v1458, %v1578
        %v1611 = vadd.f32 %v1459, %v1583
        %v1612 = vadd.f32 %v1460, %v1588
        %v1613 = vadd.f32 %v1461, %v1593
        %v1614 = vadd.f32 %v1462, %v1598
        %v1615 = vadd.f32 %v1463, %v1603
        %v1616 = vld [vmem:[#allocation3 + $0x21] sm:$0xff]
        %v1617 = vld [vmem:[#allocation3 + $0x29] sm:$0xff]
        %v1618 = vld [vmem:[#allocation3 + $0x31] sm:$0xff]
        %v1619 = vld [vmem:[#allocation3 + $0x39] sm:$0xff]
        %v1620 = vld [vmem:[#allocation3 + $0x41] sm:$0xff]
        %v1621 = vld [vmem:[#allocation3 + $0x49] sm:$0xff]
        %v1622 = vld [vmem:[#allocation3 + $0x51] sm:$0xff]
        %v1623 = vld [vmem:[#allocation3 + $0x59] sm:$0xff]
        %v1624 = vld [vmem:[#allocation3 + $0x61] sm:$0xff]
        %v1625 = vld [vmem:[#allocation3 + $0x69] sm:$0xff]
        %s1626 = scalar_lea.vmem [#allocation8], 896
        %v1627 = vld [vmem:[%s1626] sm:$0xff]
        %v1628 = vld [vmem:[%s1626 + $0x8] sm:$0xff]
        %v1629 = vld [vmem:[%s1626 + $0x10] sm:$0xff]
        %v1630 = vld [vmem:[%s1626 + $0x18] sm:$0xff]
        %v1631 = vld [vmem:[%s1626 + $0x20] sm:$0xff]
        %v1632 = vld [vmem:[%s1626 + $0x28] sm:$0xff]
        %v1633 = vld [vmem:[%s1626 + $0x30] sm:$0xff]
        %v1634 = vld [vmem:[%s1626 + $0x38] sm:$0xff]
        %v1635 = vld [vmem:[%s1626 + $0x40] sm:$0xff]
        %v1636 = vld [vmem:[%s1626 + $0x48] sm:$0xff]
        %v1637 = vld [vmem:[%s1626 + $0x50] sm:$0xff]
        %v1638 = vld [vmem:[%s1626 + $0x58] sm:$0xff]
        %v1639 = vld [vmem:[%s1626 + $0x60] sm:$0xff]
        %v1640 = vld [vmem:[%s1626 + $0x68] sm:$0xff]
        %v1641 = vld [vmem:[%s1626 + $0x70] sm:$0xff]
        %v1642 = vld [vmem:[%s1626 + $0x78] sm:$0xff]
        %1643 = vmatprep.subr.mxu0 0.0
        %1644 = vmatpush1.msra.mxu0 %v1642
        %1645 = vmatprep.subr.mxu0 0.0
        %1646 = vmatpush1.msra.mxu0 %v1641
        %1647 = vmatprep.subr.mxu0 0.0
        %1648 = vmatpush1.msra.mxu0 %v1640
        %1649 = vmatprep.subr.mxu0 0.0
        %1650 = vmatpush1.msra.mxu0 %v1639
        %1651 = vmatprep.subr.mxu0 0.0
        %1652 = vmatpush1.msra.mxu0 %v1638
        %1653 = vmatprep.subr.mxu0 0.0
        %1654 = vmatpush1.msra.mxu0 %v1637
        %1655 = vmatprep.subr.mxu0 0.0
        %1656 = vmatpush1.msra.mxu0 %v1636
        %1657 = vmatprep.subr.mxu0 0.0
        %1658 = vmatpush1.msra.mxu0 %v1635
        %1659 = vmatprep.subr.mxu0 0.0
        %1660 = vmatpush1.msra.mxu0 %v1634
        %1661 = vmatprep.subr.mxu0 0.0
        %1662 = vmatpush1.msra.mxu0 %v1633
        %1663 = vmatprep.subr.mxu0 0.0
        %1664 = vmatpush1.msra.mxu0 %v1632
        %1665 = vmatprep.subr.mxu0 0.0
        %1666 = vmatpush1.msra.mxu0 %v1631
        %1667 = vmatprep.subr.mxu0 0.0
        %1668 = vmatpush1.msra.mxu0 %v1630
        %1669 = vmatprep.subr.mxu0 0.0
        %1670 = vmatpush1.msra.mxu0 %v1629
        %1671 = vmatprep.subr.mxu0 0.0
        %1672 = vmatpush1.msra.mxu0 %v1628
        %1673 = vmatprep.subr.mxu0 0.0
        %1674 = vmatpush1.msra.mxu0 %v1627
        %1675 = vmatprep.subr.mxu0 0.0
        %1676 = vmatpush2.msra.mxu0 0.0
        %1677 = vmatprep.subr.mxu0 0.0
        %1678 = vmatpush2.msra.mxu0 0.0
        %1679 = vmatprep.subr.mxu0 0.0
        %1680 = vmatpush2.msra.mxu0 0.0
        %1681 = vmatprep.subr.mxu0 0.0
        %1682 = vmatpush2.msra.mxu0 0.0
        %1683 = vmatprep.subr.mxu0 0.0
        %1684 = vmatpush2.msra.mxu0 0.0
        %1685 = vmatprep.subr.mxu0 0.0
        %1686 = vmatpush2.msra.mxu0 0.0
        %1687 = vmatprep.subr.mxu0 0.0
        %1688 = vmatpush2.msra.mxu0 0.0
        %1689 = vmatprep.subr.mxu0 0.0
        %1690 = vmatpush2.msra.mxu0 0.0
        %1691 = vmatprep.subr.mxu0 0.0
        %1692 = vmatpush2.msra.mxu0 0.0
        %1693 = vmatprep.subr.mxu0 0.0
        %1694 = vmatpush2.msra.mxu0 0.0
        %1695 = vmatprep.subr.mxu0 0.0
        %1696 = vmatpush2.msra.mxu0 0.0
        %1697 = vmatprep.subr.mxu0 0.0
        %1698 = vmatpush2.msra.mxu0 0.0
        %1699 = vmatprep.subr.mxu0 0.0
        %1700 = vmatpush2.msra.mxu0 0.0
        %1701 = vmatprep.subr.mxu0 0.0
        %1702 = vmatpush2.msra.mxu0 0.0
        %1703 = vmatprep.subr.mxu0 0.0
        %1704 = vmatpush2.msra.mxu0 0.0
        %1705 = vmatprep.subr.mxu0 0.0
        %1706 = vmatpush2.msra.mxu0 0.0
        %1707 = vmatprep.mubr.f32.mxu0 0.0
        %1708 = vmatmul.mubr.f32.gmra.mxu0 %v1616
        %v1709 = vpop.f32.mrf.mxu0
        %v1710 = vadd.f32 0.0, %v1709
        %v1711 = vpop.f32.mrf.mxu0
        %1712 = vmatprep.mubr.f32.mxu0 0.0
        %1713 = vmatmul.mubr.f32.gmra.mxu0 %v1617
        %v1714 = vpop.f32.mrf.mxu0
        %v1715 = vadd.f32 0.0, %v1714
        %v1716 = vpop.f32.mrf.mxu0
        %1717 = vmatprep.mubr.f32.mxu0 0.0
        %1718 = vmatmul.mubr.f32.gmra.mxu0 %v1618
        %v1719 = vpop.f32.mrf.mxu0
        %v1720 = vadd.f32 0.0, %v1719
        %v1721 = vpop.f32.mrf.mxu0
        %1722 = vmatprep.mubr.f32.mxu0 0.0
        %1723 = vmatmul.mubr.f32.gmra.mxu0 %v1619
        %v1724 = vpop.f32.mrf.mxu0
        %v1725 = vadd.f32 0.0, %v1724
        %v1726 = vpop.f32.mrf.mxu0
        %1727 = vmatprep.mubr.f32.mxu0 0.0
        %1728 = vmatmul.mubr.f32.gmra.mxu0 %v1620
        %v1729 = vpop.f32.mrf.mxu0
        %v1730 = vadd.f32 0.0, %v1729
        %v1731 = vpop.f32.mrf.mxu0
        %1732 = vmatprep.mubr.f32.mxu0 0.0
        %1733 = vmatmul.mubr.f32.gmra.mxu0 %v1621
        %v1734 = vpop.f32.mrf.mxu0
        %v1735 = vadd.f32 0.0, %v1734
        %v1736 = vpop.f32.mrf.mxu0
        %1737 = vmatprep.mubr.f32.mxu0 0.0
        %1738 = vmatmul.mubr.f32.gmra.mxu0 %v1622
        %v1739 = vpop.f32.mrf.mxu0
        %v1740 = vadd.f32 0.0, %v1739
        %v1741 = vpop.f32.mrf.mxu0
        %1742 = vmatprep.mubr.f32.mxu0 0.0
        %1743 = vmatmul.mubr.f32.gmra.mxu0 %v1623
        %v1744 = vpop.f32.mrf.mxu0
        %v1745 = vadd.f32 0.0, %v1744
        %v1746 = vpop.f32.mrf.mxu0
        %1747 = vmatprep.mubr.f32.mxu0 0.0
        %1748 = vmatmul.mubr.f32.gmra.mxu0 %v1624
        %v1749 = vpop.f32.mrf.mxu0
        %v1750 = vadd.f32 0.0, %v1749
        %v1751 = vpop.f32.mrf.mxu0
        %1752 = vmatprep.mubr.f32.mxu0 0.0
        %1753 = vmatmul.mubr.f32.gmra.mxu0 %v1625
        %v1754 = vpop.f32.mrf.mxu0
        %v1755 = vadd.f32 0.0, %v1754
        %v1756 = vpop.f32.mrf.mxu0
        %1757 = vdwg.mxu0
        %v1758 = vadd.f32 %v1606, %v1710
        %v1759 = vadd.f32 %v1607, %v1715
        %v1760 = vadd.f32 %v1608, %v1720
        %v1761 = vadd.f32 %v1609, %v1725
        %v1762 = vadd.f32 %v1610, %v1730
        %v1763 = vadd.f32 %v1611, %v1735
        %v1764 = vadd.f32 %v1612, %v1740
        %v1765 = vadd.f32 %v1613, %v1745
        %v1766 = vadd.f32 %v1614, %v1750
        %v1767 = vadd.f32 %v1615, %v1755
        %v1768 = vld [vmem:[#allocation3 + $0x22] sm:$0xff]
        %v1769 = vld [vmem:[#allocation3 + $0x2a] sm:$0xff]
        %v1770 = vld [vmem:[#allocation3 + $0x32] sm:$0xff]
        %v1771 = vld [vmem:[#allocation3 + $0x3a] sm:$0xff]
        %v1772 = vld [vmem:[#allocation3 + $0x42] sm:$0xff]
        %v1773 = vld [vmem:[#allocation3 + $0x4a] sm:$0xff]
        %v1774 = vld [vmem:[#allocation3 + $0x52] sm:$0xff]
        %v1775 = vld [vmem:[#allocation3 + $0x5a] sm:$0xff]
        %v1776 = vld [vmem:[#allocation3 + $0x62] sm:$0xff]
        %v1777 = vld [vmem:[#allocation3 + $0x6a] sm:$0xff]
        %s1778 = scalar_lea.vmem [#allocation8], 1024
        %v1779 = vld [vmem:[%s1778] sm:$0xff]
        %v1780 = vld [vmem:[%s1778 + $0x8] sm:$0xff]
        %v1781 = vld [vmem:[%s1778 + $0x10] sm:$0xff]
        %v1782 = vld [vmem:[%s1778 + $0x18] sm:$0xff]
        %v1783 = vld [vmem:[%s1778 + $0x20] sm:$0xff]
        %v1784 = vld [vmem:[%s1778 + $0x28] sm:$0xff]
        %v1785 = vld [vmem:[%s1778 + $0x30] sm:$0xff]
        %v1786 = vld [vmem:[%s1778 + $0x38] sm:$0xff]
        %v1787 = vld [vmem:[%s1778 + $0x40] sm:$0xff]
        %v1788 = vld [vmem:[%s1778 + $0x48] sm:$0xff]
        %v1789 = vld [vmem:[%s1778 + $0x50] sm:$0xff]
        %v1790 = vld [vmem:[%s1778 + $0x58] sm:$0xff]
        %v1791 = vld [vmem:[%s1778 + $0x60] sm:$0xff]
        %v1792 = vld [vmem:[%s1778 + $0x68] sm:$0xff]
        %v1793 = vld [vmem:[%s1778 + $0x70] sm:$0xff]
        %v1794 = vld [vmem:[%s1778 + $0x78] sm:$0xff]
        %1795 = vmatprep.subr.mxu0 0.0
        %1796 = vmatpush1.msra.mxu0 %v1794
        %1797 = vmatprep.subr.mxu0 0.0
        %1798 = vmatpush1.msra.mxu0 %v1793
        %1799 = vmatprep.subr.mxu0 0.0
        %1800 = vmatpush1.msra.mxu0 %v1792
        %1801 = vmatprep.subr.mxu0 0.0
        %1802 = vmatpush1.msra.mxu0 %v1791
        %1803 = vmatprep.subr.mxu0 0.0
        %1804 = vmatpush1.msra.mxu0 %v1790
        %1805 = vmatprep.subr.mxu0 0.0
        %1806 = vmatpush1.msra.mxu0 %v1789
        %1807 = vmatprep.subr.mxu0 0.0
        %1808 = vmatpush1.msra.mxu0 %v1788
        %1809 = vmatprep.subr.mxu0 0.0
        %1810 = vmatpush1.msra.mxu0 %v1787
        %1811 = vmatprep.subr.mxu0 0.0
        %1812 = vmatpush1.msra.mxu0 %v1786
        %1813 = vmatprep.subr.mxu0 0.0
        %1814 = vmatpush1.msra.mxu0 %v1785
        %1815 = vmatprep.subr.mxu0 0.0
        %1816 = vmatpush1.msra.mxu0 %v1784
        %1817 = vmatprep.subr.mxu0 0.0
        %1818 = vmatpush1.msra.mxu0 %v1783
        %1819 = vmatprep.subr.mxu0 0.0
        %1820 = vmatpush1.msra.mxu0 %v1782
        %1821 = vmatprep.subr.mxu0 0.0
        %1822 = vmatpush1.msra.mxu0 %v1781
        %1823 = vmatprep.subr.mxu0 0.0
        %1824 = vmatpush1.msra.mxu0 %v1780
        %1825 = vmatprep.subr.mxu0 0.0
        %1826 = vmatpush1.msra.mxu0 %v1779
        %1827 = vmatprep.subr.mxu0 0.0
        %1828 = vmatpush2.msra.mxu0 0.0
        %1829 = vmatprep.subr.mxu0 0.0
        %1830 = vmatpush2.msra.mxu0 0.0
        %1831 = vmatprep.subr.mxu0 0.0
        %1832 = vmatpush2.msra.mxu0 0.0
        %1833 = vmatprep.subr.mxu0 0.0
        %1834 = vmatpush2.msra.mxu0 0.0
        %1835 = vmatprep.subr.mxu0 0.0
        %1836 = vmatpush2.msra.mxu0 0.0
        %1837 = vmatprep.subr.mxu0 0.0
        %1838 = vmatpush2.msra.mxu0 0.0
        %1839 = vmatprep.subr.mxu0 0.0
        %1840 = vmatpush2.msra.mxu0 0.0
        %1841 = vmatprep.subr.mxu0 0.0
        %1842 = vmatpush2.msra.mxu0 0.0
        %1843 = vmatprep.subr.mxu0 0.0
        %1844 = vmatpush2.msra.mxu0 0.0
        %1845 = vmatprep.subr.mxu0 0.0
        %1846 = vmatpush2.msra.mxu0 0.0
        %1847 = vmatprep.subr.mxu0 0.0
        %1848 = vmatpush2.msra.mxu0 0.0
        %1849 = vmatprep.subr.mxu0 0.0
        %1850 = vmatpush2.msra.mxu0 0.0
        %1851 = vmatprep.subr.mxu0 0.0
        %1852 = vmatpush2.msra.mxu0 0.0
        %1853 = vmatprep.subr.mxu0 0.0
        %1854 = vmatpush2.msra.mxu0 0.0
        %1855 = vmatprep.subr.mxu0 0.0
        %1856 = vmatpush2.msra.mxu0 0.0
        %1857 = vmatprep.subr.mxu0 0.0
        %1858 = vmatpush2.msra.mxu0 0.0
        %1859 = vmatprep.mubr.f32.mxu0 0.0
        %1860 = vmatmul.mubr.f32.gmra.mxu0 %v1768
        %v1861 = vpop.f32.mrf.mxu0
        %v1862 = vadd.f32 0.0, %v1861
        %v1863 = vpop.f32.mrf.mxu0
        %1864 = vmatprep.mubr.f32.mxu0 0.0
        %1865 = vmatmul.mubr.f32.gmra.mxu0 %v1769
        %v1866 = vpop.f32.mrf.mxu0
        %v1867 = vadd.f32 0.0, %v1866
        %v1868 = vpop.f32.mrf.mxu0
        %1869 = vmatprep.mubr.f32.mxu0 0.0
        %1870 = vmatmul.mubr.f32.gmra.mxu0 %v1770
        %v1871 = vpop.f32.mrf.mxu0
        %v1872 = vadd.f32 0.0, %v1871
        %v1873 = vpop.f32.mrf.mxu0
        %1874 = vmatprep.mubr.f32.mxu0 0.0
        %1875 = vmatmul.mubr.f32.gmra.mxu0 %v1771
        %v1876 = vpop.f32.mrf.mxu0
        %v1877 = vadd.f32 0.0, %v1876
        %v1878 = vpop.f32.mrf.mxu0
        %1879 = vmatprep.mubr.f32.mxu0 0.0
        %1880 = vmatmul.mubr.f32.gmra.mxu0 %v1772
        %v1881 = vpop.f32.mrf.mxu0
        %v1882 = vadd.f32 0.0, %v1881
        %v1883 = vpop.f32.mrf.mxu0
        %1884 = vmatprep.mubr.f32.mxu0 0.0
        %1885 = vmatmul.mubr.f32.gmra.mxu0 %v1773
        %v1886 = vpop.f32.mrf.mxu0
        %v1887 = vadd.f32 0.0, %v1886
        %v1888 = vpop.f32.mrf.mxu0
        %1889 = vmatprep.mubr.f32.mxu0 0.0
        %1890 = vmatmul.mubr.f32.gmra.mxu0 %v1774
        %v1891 = vpop.f32.mrf.mxu0
        %v1892 = vadd.f32 0.0, %v1891
        %v1893 = vpop.f32.mrf.mxu0
        %1894 = vmatprep.mubr.f32.mxu0 0.0
        %1895 = vmatmul.mubr.f32.gmra.mxu0 %v1775
        %v1896 = vpop.f32.mrf.mxu0
        %v1897 = vadd.f32 0.0, %v1896
        %v1898 = vpop.f32.mrf.mxu0
        %1899 = vmatprep.mubr.f32.mxu0 0.0
        %1900 = vmatmul.mubr.f32.gmra.mxu0 %v1776
        %v1901 = vpop.f32.mrf.mxu0
        %v1902 = vadd.f32 0.0, %v1901
        %v1903 = vpop.f32.mrf.mxu0
        %1904 = vmatprep.mubr.f32.mxu0 0.0
        %1905 = vmatmul.mubr.f32.gmra.mxu0 %v1777
        %v1906 = vpop.f32.mrf.mxu0
        %v1907 = vadd.f32 0.0, %v1906
        %v1908 = vpop.f32.mrf.mxu0
        %1909 = vdwg.mxu0
        %v1910 = vadd.f32 %v1758, %v1862
        %v1911 = vadd.f32 %v1759, %v1867
        %v1912 = vadd.f32 %v1760, %v1872
        %v1913 = vadd.f32 %v1761, %v1877
        %v1914 = vadd.f32 %v1762, %v1882
        %v1915 = vadd.f32 %v1763, %v1887
        %v1916 = vadd.f32 %v1764, %v1892
        %v1917 = vadd.f32 %v1765, %v1897
        %v1918 = vadd.f32 %v1766, %v1902
        %v1919 = vadd.f32 %v1767, %v1907
        %v1920 = vld [vmem:[%s5] sm:$0x1]
        %v1922 = vlaneseq
        %v1923 = vshrl.u32 %v1922, 7
        %v1924 = vsub.s32 0, %v1923
        %v1925 = vrot.slane %v1920, %v1924
        %v1927 = vmul.f32 %v1910, %v1925
        %v1928 = vmul.f32 %v1911, %v1925
        %v1929 = vmul.f32 %v1912, %v1925
        %v1930 = vmul.f32 %v1913, %v1925
        %v1931 = vmul.f32 %v1914, %v1925
        %v1932 = vmul.f32 %v1915, %v1925
        %v1933 = vmul.f32 %v1916, %v1925
        %v1934 = vmul.f32 %v1917, %v1925
        %v1935 = vmul.f32 %v1918, %v1925
        %v1936 = vmul.f32 %v1919, %v1925
        %v1937 = vld [vmem:[%s6] sm:$0x1]
        %v1939 = vlaneseq
        %v1940 = vshrl.u32 %v1939, 7
        %v1941 = vsub.s32 0, %v1940
        %v1942 = vrot.slane %v1937, %v1941
        %v1944 = vadd.f32 %v1927, %v1942
        %v1945 = vadd.f32 %v1928, %v1942
        %v1946 = vadd.f32 %v1929, %v1942
        %v1947 = vadd.f32 %v1930, %v1942
        %v1948 = vadd.f32 %v1931, %v1942
        %v1949 = vadd.f32 %v1932, %v1942
        %v1950 = vadd.f32 %v1933, %v1942
        %v1951 = vadd.f32 %v1934, %v1942
        %v1952 = vadd.f32 %v1935, %v1942
        %v1953 = vadd.f32 %v1936, %v1942
        %v1954 = vmax.f32 %v1944, 0.0
        %v1955 = vmax.f32 %v1945, 0.0
        %v1956 = vmax.f32 %v1946, 0.0
        %v1957 = vmax.f32 %v1947, 0.0
        %v1958 = vmax.f32 %v1948, 0.0
        %v1959 = vmax.f32 %v1949, 0.0
        %v1960 = vmax.f32 %v1950, 0.0
        %v1961 = vmax.f32 %v1951, 0.0
        %v1962 = vmax.f32 %v1952, 0.0
        %v1963 = vmax.f32 %v1953, 0.0
        %1964 = vst [vmem:[%s274] sm:$0xff] %v1954
        %1965 = vst [vmem:[%s274 + $0x8] sm:$0xff] %v1955
        %1966 = vst [vmem:[%s274 + $0x10] sm:$0xff] %v1956
        %1967 = vst [vmem:[%s274 + $0x18] sm:$0xff] %v1957
        %1968 = vst [vmem:[%s274 + $0x20] sm:$0xff] %v1958
        %1969 = vst [vmem:[%s274 + $0x28] sm:$0xff] %v1959
        %1970 = vst [vmem:[%s274 + $0x30] sm:$0xff] %v1960
        %1971 = vst [vmem:[%s274 + $0x38] sm:$0xff] %v1961
        %1972 = vst [vmem:[%s274 + $0x40] sm:$0xff] %v1962
        %1973 = vst [vmem:[%s274 + $0x48] sm:$0xff] %v1963
        %s1974 = sand.u32 %s171, 1
        %s1975 = scalar_lea.sflag [#allocation7], %s1974
        %s1976 = sand.u32 %s171, 1
        %s1977 = smul.addr %s1976, 80
        %s1978 = scalar_lea.vmem [#allocation10], %s1977
        // Predicated region
        $region69: #{tpu_custom_call.1} parent=43 // pred_check
          %p1979 = pneg %p181
        $region70: #{tpu_custom_call.1} parent=43 // pred_check_branch
          %1981 = sbr.rel (%p1979) target = $region72
        $region71: #{tpu_custom_call.1} parent=43 // pred_region
          %s1982 = smul.u32 5, %s28
          %s1984 = ssub.s32 1280, 1280
          %1985 = vsyncadd %s1975, %s1984
          %s1986 = smul.addr %s1982, 2
          %s1987 = smul.addr %s27, 30
          %s1988 = sadd.s32 %s1986, %s1987
          %s1989 = smul.addr %s1988, 128
          %s1990 = scalar_lea.hbm %s7, %s1989
          %s1991 = sshll.u32 %s1978, 4
          %s1992 = int_to_ptr.vmem [resolvable:$true] %s1991
          %1997 = dma.vmem_to_hbm [thread:$0]  %s1992, 1280, %s1990, %s1975, 128, 128, 8
        $region72: #{tpu_custom_call.1} parent=43 // pred_fallthru
          _
      $region44: #{tpu_custom_call.1} parent=5 // pred_fallthru
        _
      %p1998 = scmp.le.s32.totalorder 2, %s18
      // Predicated region
      $region73: #{tpu_custom_call.1} parent=5 // pred_check
        %p1999 = pneg %p1998
      $region74: #{tpu_custom_call.1} parent=5 // pred_check_branch
        %2001 = sbr.rel (%p1999) target = $region76
      $region75: #{tpu_custom_call.1} parent=5 // pred_region
        %s2002 = ssub.s32 %s18, 2
        // Predicated region
        $region77: #{tpu_custom_call.1} parent=75 // pred_check
          %p2003 = pneg %p187
        $region78: #{tpu_custom_call.1} parent=75 // pred_check_branch
          %2005 = sbr.rel (%p2003) target = $region80
        $region79: #{tpu_custom_call.1} parent=75 // pred_region
          %s2006 = sand.u32 %s172, 1
          %s2007 = scalar_lea.sflag [#allocation7], %s2006
          %s2008 = sand.u32 %s172, 1
          %s2009 = smul.addr %s2008, 80
          %s2010 = scalar_lea.vmem [#allocation10], %s2009
          %2011 = dma.done %s2007, 1280
        $region80: #{tpu_custom_call.1} parent=75 // pred_fallthru
          _
      $region76: #{tpu_custom_call.1} parent=5 // pred_fallthru
        _
    $region6: #{tpu_custom_call.1} parent=1 // loop_footer
      %s22 = sadd.s32 1, %s18
    $region7: #{tpu_custom_call.1} parent=1 // loop_footer_branch
      %17 = sbr.rel target = $region3
    $region8: #{tpu_custom_call.1} parent=1 // loop_exit
      _
    %2012 = vsyncpa [#allocation6], 1
    %s2013 = scalar_lea.sflag [#allocation6], 1
    %2014 = vsyncpa %s2013, 1
    %2015 = vsyncpa [#allocation9], 1
    %2016 = vsyncpa [#allocation7], 1
    %s2017 = scalar_lea.sflag [#allocation7], 1
    %2018 = vsyncpa %s2017, 1
  %2019 = vsyncmov [#allocation4]
  %s2020 = vpop.sfrf %2019
  %p2021 = scmp.eq.s32.totalorder %s2020, 0
  %p2022 = pneg %p2021
  %2024 = shalt.err (%p2022)
  %s2025 = scalar_lea.sflag [#allocation4], 1
  %2026 = vsyncmov %s2025
  %s2027 = vpop.sfrf %2026
  %p2028 = scmp.eq.s32.totalorder %s2027, 0
  %p2029 = pneg %p2028
  %2031 = shalt.err (%p2029)

</llo_original>
